<compile_context>
chip_gen: v7x
topology: tpu7x:2x2x1
jax: 0.10.0
libtpu: 0.0.40
codegen_flags: <defaults>
</compile_context>

<pallas_src>
import functools
import math

import jax
import jax.numpy as jnp
from jax import lax
from jax.experimental import pallas as pl
from jax.experimental.pallas import tpu as pltpu


def _round_up(n, m):
    return ((n + m - 1) // m) * m


def _cdiv(a, b):
    return -(-a // b)


# ----------------------------------------------------------------------------
# Pallas kernel: block_t masked-RNN steps for one (direction, time-block).
# ----------------------------------------------------------------------------
def _masked_rnn_kernel(xp_ref, m_ref, h0_ref, whh_ref, out_ref, h_scr, *,
                       block_t):
    """Shapes of the kernel-visible blocks:
         xp_ref : (block_t, B_pad, H_pad) bf16   hoisted x @ W_ih + b
         m_ref  : (block_t, B_pad, 1)     f32    0/1 mask (shared by directions)
         h0_ref : (B_pad, H_pad)          f32    initial hidden state (this dir)
         whh_ref: (H_pad, H_pad)          bf16   recurrent weights (this dir)
         out_ref: (block_t, B_pad, H_pad) bf16   outputs, ORIGINAL time order
         h_scr  : (B_pad, H_pad)          f32    carried state across blocks
    """
    d = pl.program_id(0)            # direction: 0 = forward, 1 = reverse

    # Reset the carried hidden state at the start of each direction's sequence.
    @pl.when(pl.program_id(1) == 0)
    def _():
        h_scr[...] = h0_ref[...]

    w = whh_ref[...]                # bf16 -> native MXU operand, no upcast

    def step(i, h):
        # Forward walks local time 0..block_t-1; reverse walks block_t-1..0, so
        # together with the reversed block index_map the stored block is already
        # in original time order for both directions.
        li = i + d * (block_t - 1 - 2 * i)
        xp = xp_ref[li].astype(jnp.float32)                 # bf16 stream -> f32
        hh = jnp.dot(h.astype(jnp.bfloat16), w,             # bf16 x bf16 -> f32
                     preferred_element_type=jnp.float32)
        h_next = jnp.tanh(xp + hh)
        h = h + (h_next - h) * m_ref[li]                    # masked update
        out_ref[li] = h.astype(out_ref.dtype)
        return h

    # fori_loop(unroll=True): LLO visibility while bounding vreg live ranges.
    h_scr[...] = lax.fori_loop(0, block_t, step, h_scr[...], unroll=True)


def masked_rnn_layer_stack(xp, mask3, h0_stack, whh_stack, *,
                           time_block=32, single_buffer_weights=False):
    """Masked tanh-RNN recurrence for `nd` independent directions in one call.

    xp:         (nd, T, B, H)      hoisted x @ W_ih + b per direction, in
                                   ORIGINAL time order for both directions.
    mask3:      (T, B, 1) f32      0/1 mask shared by all directions.
    h0_stack:   (nd, B, H) f32     initial hidden states.
    whh_stack:  (nd, H, H) bf16    recurrent weights.
    Returns (nd, T, B, H) bf16 hidden states in ORIGINAL time order.
    """
    nd, T, B, H = xp.shape
    nb = _cdiv(T, time_block)            # number of time blocks
    tb = _cdiv(T, nb)                    # steps per block (minimizes padding)
    T_pad = nb * tb
    B_pad = _round_up(B, 8)              # sublane alignment
    H_pad = _round_up(H, 128)            # lane alignment -> lane-dense stores

    # Zero padding is exact: padded hidden columns stay 0 forever, padded batch
    # rows and padded time steps carry mask 0 so they never change the state.
    xp_p = jnp.pad(xp.astype(jnp.bfloat16),
                   ((0, 0), (0, T_pad - T), (0, B_pad - B), (0, H_pad - H)))
    m_p = jnp.pad(mask3.astype(jnp.float32),
                  ((0, T_pad - T), (0, B_pad - B), (0, 0)))
    h0_p = jnp.pad(h0_stack.astype(jnp.float32),
                   ((0, 0), (0, B_pad - B), (0, H_pad - H)))
    w_p = jnp.pad(whh_stack.astype(jnp.bfloat16),
                  ((0, 0), (0, H_pad - H), (0, H_pad - H)))

    # Reverse direction (d == 1) walks the time blocks back-to-front.
    def tmap(d, b):
        return b + d * (nb - 1 - 2 * b)

    def const_spec(block_shape, index_map):
        # Time-invariant blocks (index never changes along the time axis): a
        # second pipeline buffer is dead VMEM.  Off by default for safety.
        if single_buffer_weights:
            return pl.BlockSpec(block_shape, index_map,
                                pipeline_mode=pl.Buffered(1))
        return pl.BlockSpec(block_shape, index_map)

    # Explicit VMEM budget from the actual blocks (double-buffered streams +
    # weights/h0 + carried-state scratch), with margin, capped for v7x (64 MiB).
    stream = tb * B_pad * H_pad * 2           # bf16 xp / out block
    needed = (2 * (stream + stream + tb * B_pad * 4)
              + 2 * (H_pad * H_pad * 2 + B_pad * H_pad * 4)
              + B_pad * H_pad * 4)
    vmem_limit = int(min(64 * 1024 * 1024, max(32 * 1024 * 1024, 2 * needed)))

    out = pl.pallas_call(
        functools.partial(_masked_rnn_kernel, block_t=tb),
        out_shape=jax.ShapeDtypeStruct((nd, T_pad, B_pad, H_pad), jnp.bfloat16),
        grid_spec=pltpu.PrefetchScalarGridSpec(
            num_scalar_prefetch=0,
            grid=(nd, nb),
            in_specs=[
                pl.BlockSpec((None, tb, B_pad, H_pad),
                             lambda d, b: (d, tmap(d, b), 0, 0)),     # xproj
                pl.BlockSpec((tb, B_pad, 1),
                             lambda d, b: (tmap(d, b), 0, 0)),        # mask
                const_spec((None, B_pad, H_pad),
                           lambda d, b: (d, 0, 0)),                   # h0
                const_spec((None, H_pad, H_pad),
                           lambda d, b: (d, 0, 0)),                   # W_hh
            ],
            out_specs=pl.BlockSpec((None, tb, B_pad, H_pad),
                                   lambda d, b: (d, tmap(d, b), 0, 0)),
            scratch_shapes=[pltpu.VMEM((B_pad, H_pad), jnp.float32)],
        ),
        compiler_params=pltpu.CompilerParams(
            # Direction axis is independent (usable by both v7x TensorCores);
            # the time axis is the true recurrence -> sequential.
            dimension_semantics=("parallel", "arbitrary"),
            vmem_limit_bytes=vmem_limit),
    )(xp_p, m_p, h0_p, w_p)
    return out[:, :T, :B, :H]


# ----------------------------------------------------------------------------
# MaskedRNNBase equivalent (Cell = nn.RNNCell with tanh nonlinearity).
# ----------------------------------------------------------------------------
class MaskedRNN:
    def __init__(self, input_size, hidden_size, num_layers=1, bias=True,
                 batch_first=False, layer_dropout=0.0, step_dropout=0.0,
                 bidirectional=False, time_block=32,
                 single_buffer_weights=False, key=None):
        self.input_size = input_size
        self.hidden_size = hidden_size
        self.num_layers = num_layers
        self.bias = bias
        self.batch_first = batch_first
        self.bidirectional = bidirectional
        self.num_directions = 2 if bidirectional else 1
        self.time_block = time_block
        self.single_buffer_weights = single_buffer_weights
        # TODO(synk): layer_dropout / step_dropout (training-mode dropout) are
        # not implemented; this matches the reference module in eval mode.
        scale = 1.0 / math.sqrt(hidden_size)
        if key is None:
            key = jax.random.PRNGKey(0)
        self.params = []
        for layer in range(num_layers):
            for _direction in range(self.num_directions):
                layer_input_size = (input_size if layer == 0
                                    else hidden_size * self.num_directions)
                key, k1, k2, k3, k4 = jax.random.split(key, 5)
                w_ih = jax.random.uniform(
                    k1, (layer_input_size, hidden_size),
                    minval=-scale, maxval=scale,
                    dtype=jnp.float32).astype(jnp.bfloat16)
                w_hh = jax.random.uniform(
                    k2, (hidden_size, hidden_size),
                    minval=-scale, maxval=scale,
                    dtype=jnp.float32).astype(jnp.bfloat16)
                if bias:
                    # b_ih + b_hh like torch's RNNCell (sum of two uniforms).
                    b = (jax.random.uniform(k3, (hidden_size,), minval=-scale,
                                            maxval=scale, dtype=jnp.float32)
                         + jax.random.uniform(k4, (hidden_size,), minval=-scale,
                                              maxval=scale, dtype=jnp.float32))
                else:
                    b = jnp.zeros((hidden_size,), jnp.float32)
                self.params.append((w_ih, w_hh, b))

    def _input_projection(self, x_or_stack, layer, direction):
        """x @ W_ih + b as a native bf16 MXU matmul with f32 accumulation."""
        w_ih, _, b = self.params[layer * self.num_directions + direction]
        if layer == 0:
            xp = jnp.einsum('tbd,dh->tbh', x_or_stack.astype(jnp.bfloat16),
                            w_ih, preferred_element_type=jnp.float32)
        else:
            # x_or_stack: (nd, T, B, H) bf16 outputs of the previous layer.
            # Contract directly over (direction, hidden): avoids materializing
            # the (T, B, nd*H) concatenation between layers.
            nd = x_or_stack.shape[0]
            w3 = w_ih.reshape(nd, self.hidden_size, self.hidden_size)
            xp = jnp.einsum('stbh,shd->tbd', x_or_stack.astype(jnp.bfloat16),
                            w3, preferred_element_type=jnp.float32)
        return xp + b

    def __call__(self, input, mask=None, hx=None):
        if self.batch_first:
            input = jnp.transpose(input, (1, 0, 2))
            if mask is not None:
                mask = jnp.transpose(mask, (1, 0))
        input = input.astype(jnp.float32)
        T, B, _ = input.shape
        nd = self.num_directions
        if hx is None:
            hx = jnp.zeros((self.num_layers * nd, B, self.hidden_size),
                           jnp.float32)
        else:
            hx = hx.astype(jnp.float32)
        if mask is None:
            mask3 = jnp.ones((T, B, 1), jnp.float32)
        else:
            mask3 = mask.astype(jnp.float32).reshape(T, B, 1)

        next_hidden = []
        x = input                               # layer-0 input; then (nd,T,B,H)
        out = None
        for layer in range(self.num_layers):
            xp = jnp.stack(
                [self._input_projection(x, layer, d) for d in range(nd)], axis=0)
            h0 = jnp.stack([hx[layer * nd + d] for d in range(nd)], axis=0)
            whh = jnp.stack([self.params[layer * nd + d][1] for d in range(nd)],
                            axis=0)
            out = masked_rnn_layer_stack(
                xp, mask3, h0, whh,
                time_block=self.time_block,
                single_buffer_weights=self.single_buffer_weights)
            # out: (nd, T, B, H) bf16, original time order for both directions.
            next_hidden.append(out[0, T - 1])   # forward final hidden
            if nd == 2:
                next_hidden.append(out[1, 0])   # reverse final hidden
            x = out                             # stays stacked; no concat here

        output = out[0] if nd == 1 else jnp.concatenate([out[0], out[1]], -1)
        output = output.astype(jnp.float32)
        hn = jnp.stack(next_hidden, axis=0).astype(jnp.float32)
        if self.batch_first:
            output = jnp.transpose(output, (1, 0, 2))
        return output, hn


# ----------------------------------------------------------------------------
# References for validation.
# ----------------------------------------------------------------------------
def _mirror_forward(model, input, mask):
    """Pure-JAX reference mirroring the kernel's exact dtype flow
    (bf16 matmul operands / streams, f32 accumulation and carried state)."""
    T, B, _ = input.shape
    nd = model.num_directions
    H = model.hidden_size
    mask3 = mask.astype(jnp.float32).reshape(T, B, 1)
    hx = jnp.zeros((model.num_layers * nd, B, H), jnp.float32)
    next_hidden, x = [], input
    for layer in range(model.num_layers):
        outs = []
        for d in range(nd):
            l = layer * nd + d
            w_ih, w_hh, b = model.params[l]
            if layer == 0:
                xp = jnp.einsum('tbd,dh->tbh', x.astype(jnp.bfloat16), w_ih,
                                preferred_element_type=jnp.float32) + b
            else:
                w3 = w_ih.reshape(nd, H, H)
                xp = jnp.einsum('stbh,shd->tbd', x.astype(jnp.bfloat16), w3,
                                preferred_element_type=jnp.float32) + b
            xp = xp.astype(jnp.bfloat16)            # kernel streams xproj bf16
            h = hx[l]
            out_t = [None] * T
            steps = range(T - 1, -1, -1) if d == 1 else range(T)
            for t in steps:
                hh = jnp.dot(h.astype(jnp.bfloat16), w_hh,
                             preferred_element_type=jnp.float32)
                h_next = jnp.tanh(xp[t].astype(jnp.float32) + hh)
                h = h + (h_next - h) * mask3[t]
                out_t[t] = h.astype(jnp.bfloat16)   # kernel stores bf16 outputs
            outs.append(jnp.stack(out_t, 0))
            next_hidden.append(out_t[T - 1] if d == 0 else out_t[0])
        x = jnp.stack(outs, 0)
    output = x[0] if nd == 1 else jnp.concatenate([x[0], x[1]], -1)
    return output.astype(jnp.float32), jnp.stack(next_hidden, 0).astype(jnp.float32)


def _ref_forward_f32(model, input, mask):
    """Full-f32 MaskedRNNBase semantics (same stored weights, f32 math)."""
    T, B, _ = input.shape
    nd = model.num_directions
    mask3 = mask.astype(jnp.float32).reshape(T, B, 1)
    hx = jnp.zeros((model.num_layers * nd, B, model.hidden_size), jnp.float32)
    next_hidden, x = [], input.astype(jnp.float32)
    for layer in range(model.num_layers):
        outs = []
        for d in range(nd):
            l = layer * nd + d
            w_ih, w_hh, b = model.params[l]
            w_ih = w_ih.astype(jnp.float32)
            w_hh = w_hh.astype(jnp.float32)
            h = hx[l]
            out_t = [None] * T
            steps = range(T - 1, -1, -1) if d == 1 else range(T)
            for t in steps:
                h_next = jnp.tanh(x[t] @ w_ih + h @ w_hh + b)
                h = h + (h_next - h) * mask3[t]
                out_t[t] = h
            outs.append(jnp.stack(out_t, 0))
            next_hidden.append(h)
        x = jnp.concatenate(outs, -1) if nd > 1 else outs[0]
    return x, jnp.stack(next_hidden, 0)


if __name__ == "__main__":
    T, B, D, H = 10, 2, 16, 32
    num_layers, bidirectional = 2, True

    key = jax.random.PRNGKey(0)
    k_model, k_x = jax.random.split(key, 2)

    model = MaskedRNN(D, H, num_layers=num_layers, bias=True,
                      batch_first=False, bidirectional=bidirectional,
                      time_block=32, key=k_model)

    x = jax.random.normal(k_x, (T, B, D), dtype=jnp.float32)
    # Mask like padded sequences: ones then zeros per batch element.
    lengths = jnp.array([T, T - 3], dtype=jnp.int32)
    mask = (jnp.arange(T)[:, None] < lengths[None, :]).astype(jnp.float32)  # (T, B)

    output, hn = model(x, mask=mask)
    output = jax.block_until_ready(output)
    hn = jax.block_until_ready(hn)

    nd = 2 if bidirectional else 1
    assert output.shape == (T, B, H * nd)
    assert hn.shape == (num_layers * nd, B, H)

    # Exact-dtype mirror of the kernel math (bf16 MXU operands, f32 state).
    mir_out, mir_hn = _mirror_forward(model, x, mask)
    assert jnp.allclose(output, mir_out, atol=2e-3, rtol=2e-3), \
        float(jnp.max(jnp.abs(output - mir_out)))
    assert jnp.allclose(hn, mir_hn, atol=2e-3, rtol=2e-3), \
        float(jnp.max(jnp.abs(hn - mir_hn)))

    # Loose check against the full-f32 module semantics (only difference is
    # bf16 rounding through the recurrence, as accepted in the perf review).
    ref_out, ref_hn = _ref_forward_f32(model, x, mask)
    assert float(jnp.max(jnp.abs(output - ref_out))) < 0.1
    assert float(jnp.max(jnp.abs(hn - ref_hn))) < 0.1

    print("KERNEL_OK")
</pallas_src>

<mosaic_0001>
module attributes {stable_mosaic.version = 11 : i64} {
  func.func @_masked_rnn_kernel(%arg0: i32, %arg1: i32, %arg2: memref<1x10x8x128xbf16, #tpu.memory_space<vmem>>, %arg3: memref<10x8x1xf32, #tpu.memory_space<vmem>>, %arg4: memref<1x8x128xf32, #tpu.memory_space<vmem>>, %arg5: memref<1x128x128xbf16, #tpu.memory_space<vmem>>, %arg6: memref<1x10x8x128xbf16, #tpu.memory_space<vmem>>, %arg7: memref<8x128xf32, #tpu.memory_space<vmem>>) attributes {dimension_semantics = [#tpu.dimension_semantics<parallel>, #tpu.dimension_semantics<arbitrary>], iteration_bounds = array<i64: 2, 1>, scalar_prefetch = 0 : i64, scratch_operands = 1 : i64, tpu.core_type = #tpu.core_type<tc>, window_params = [{transform_indices = @transform_0, window_bounds = array<i64: 1, 10, 8, 128>}, {transform_indices = @transform_1, window_bounds = array<i64: 10, 8, 1>}, {transform_indices = @transform_2, window_bounds = array<i64: 1, 8, 128>}, {transform_indices = @transform_3, window_bounds = array<i64: 1, 128, 128>}, {transform_indices = @transform_4, window_bounds = array<i64: 1, 10, 8, 128>}]} {
    %c0_i32 = arith.constant 0 : i32
    %0 = arith.cmpi eq, %arg1, %c0_i32 : i32
    %1 = arith.extui %0 : i1 to i32
    %c0_i32_0 = arith.constant 0 : i32
    %2 = arith.cmpi ne, %1, %c0_i32_0 : i32
    scf.if %2 {
      %c0_117 = arith.constant 0 : index
      %c0_118 = arith.constant 0 : index
      %c0_119 = arith.constant 0 : index
      %247 = vector.load %arg4[%c0_117, %c0_118, %c0_119] : memref<1x8x128xf32, #tpu.memory_space<vmem>>, vector<1x8x128xf32>
      %248 = vector.shape_cast %247 : vector<1x8x128xf32> to vector<8x128xf32>
      %c0_120 = arith.constant 0 : index
      %c0_121 = arith.constant 0 : index
      %249 = vector.load %arg7[%c0_120, %c0_121] : memref<8x128xf32, #tpu.memory_space<vmem>>, vector<8x128xf32>
      tpu.vector_store %arg7[%c0_120, %c0_121], %248 {strides = array<i32>} : memref<8x128xf32, #tpu.memory_space<vmem>>, vector<8x128xf32>,
    } else {
    }
    %c0 = arith.constant 0 : index
    %c0_1 = arith.constant 0 : index
    %c0_2 = arith.constant 0 : index
    %3 = vector.load %arg5[%c0, %c0_1, %c0_2] : memref<1x128x128xbf16, #tpu.memory_space<vmem>>, vector<1x128x128xbf16>
    %4 = vector.shape_cast %3 : vector<1x128x128xbf16> to vector<128x128xbf16>
    %c0_3 = arith.constant 0 : index
    %c0_4 = arith.constant 0 : index
    %5 = vector.load %arg7[%c0_3, %c0_4] : memref<8x128xf32, #tpu.memory_space<vmem>>, vector<8x128xf32>
    %c0_i32_5 = arith.constant 0 : i32
    %c2_i32 = arith.constant 2 : i32
    %6 = arith.muli %c2_i32, %c0_i32_5 : i32
    %c9_i32 = arith.constant 9 : i32
    %7 = arith.subi %c9_i32, %6 : i32
    %8 = arith.muli %arg0, %7 : i32
    %9 = arith.addi %c0_i32_5, %8 : i32
    %c0_6 = arith.constant 0 : index
    %10 = arith.index_cast %9 : i32 to index
    %c0_7 = arith.constant 0 : index
    %c0_8 = arith.constant 0 : index
    %11 = vector.load %arg2[%c0_6, %10, %c0_7, %c0_8] : memref<1x10x8x128xbf16, #tpu.memory_space<vmem>>, vector<1x1x8x128xbf16>
    %12 = vector.shape_cast %11 : vector<1x1x8x128xbf16> to vector<8x128xbf16>
    %13 = arith.extf %12 : vector<8x128xbf16> to vector<8x128xf32>
    %14 = arith.truncf %5 : vector<8x128xf32> to vector<8x128xbf16>
    %cst = arith.constant dense<0.000000e+00> : vector<8x128xf32>
    %15 = tpu.matmul %14, %4, %cst {dimension_numbers = #tpu.dot_dimension_numbers<[1], [0], [0], [1], [0, 0, 1, 1], [], []>} : vector<8x128xbf16>, vector<128x128xbf16>, vector<8x128xf32> -> vector<8x128xf32>
    %16 = arith.addf %13, %15 : vector<8x128xf32>
    %17 = math.tanh %16 : vector<8x128xf32>
    %18 = arith.subf %17, %5 : vector<8x128xf32>
    %19 = arith.index_cast %9 : i32 to index
    %c0_9 = arith.constant 0 : index
    %c0_10 = arith.constant 0 : index
    %20 = vector.load %arg3[%19, %c0_9, %c0_10] : memref<10x8x1xf32, #tpu.memory_space<vmem>>, vector<1x8x1xf32>
    %21 = vector.shape_cast %20 : vector<1x8x1xf32> to vector<8x1xf32>
    %22 = vector.broadcast %21 : vector<8x1xf32> to vector<8x128xf32>
    %23 = arith.mulf %18, %22 : vector<8x128xf32>
    %24 = arith.addf %5, %23 : vector<8x128xf32>
    %25 = arith.truncf %24 : vector<8x128xf32> to vector<8x128xbf16>
    %c0_11 = arith.constant 0 : index
    %26 = arith.index_cast %9 : i32 to index
    %c0_12 = arith.constant 0 : index
    %c0_13 = arith.constant 0 : index
    %27 = vector.load %arg6[%c0_11, %26, %c0_12, %c0_13] : memref<1x10x8x128xbf16, #tpu.memory_space<vmem>>, vector<1x1x8x128xbf16>
    %28 = vector.shape_cast %27 : vector<1x1x8x128xbf16> to vector<8x128xbf16>
    %29 = vector.shape_cast %25 : vector<8x128xbf16> to vector<1x1x8x128xbf16>
    tpu.vector_store %arg6[%c0_11, %26, %c0_12, %c0_13], %29 {strides = array<i32>} : memref<1x10x8x128xbf16, #tpu.memory_space<vmem>>, vector<1x1x8x128xbf16>,
    %c1_i32 = arith.constant 1 : i32
    %c2_i32_14 = arith.constant 2 : i32
    %30 = arith.muli %c2_i32_14, %c1_i32 : i32
    %c9_i32_15 = arith.constant 9 : i32
    %31 = arith.subi %c9_i32_15, %30 : i32
    %32 = arith.muli %arg0, %31 : i32
    %33 = arith.addi %c1_i32, %32 : i32
    %c0_16 = arith.constant 0 : index
    %34 = arith.index_cast %33 : i32 to index
    %c0_17 = arith.constant 0 : index
    %c0_18 = arith.constant 0 : index
    %35 = vector.load %arg2[%c0_16, %34, %c0_17, %c0_18] : memref<1x10x8x128xbf16, #tpu.memory_space<vmem>>, vector<1x1x8x128xbf16>
    %36 = vector.shape_cast %35 : vector<1x1x8x128xbf16> to vector<8x128xbf16>
    %37 = arith.extf %36 : vector<8x128xbf16> to vector<8x128xf32>
    %38 = arith.truncf %24 : vector<8x128xf32> to vector<8x128xbf16>
    %cst_19 = arith.constant dense<0.000000e+00> : vector<8x128xf32>
    %39 = tpu.matmul %38, %4, %cst_19 {dimension_numbers = #tpu.dot_dimension_numbers<[1], [0], [0], [1], [0, 0, 1, 1], [], []>} : vector<8x128xbf16>, vector<128x128xbf16>, vector<8x128xf32> -> vector<8x128xf32>
    %40 = arith.addf %37, %39 : vector<8x128xf32>
    %41 = math.tanh %40 : vector<8x128xf32>
    %42 = arith.subf %41, %24 : vector<8x128xf32>
    %43 = arith.index_cast %33 : i32 to index
    %c0_20 = arith.constant 0 : index
    %c0_21 = arith.constant 0 : index
    %44 = vector.load %arg3[%43, %c0_20, %c0_21] : memref<10x8x1xf32, #tpu.memory_space<vmem>>, vector<1x8x1xf32>
    %45 = vector.shape_cast %44 : vector<1x8x1xf32> to vector<8x1xf32>
    %46 = vector.broadcast %45 : vector<8x1xf32> to vector<8x128xf32>
    %47 = arith.mulf %42, %46 : vector<8x128xf32>
    %48 = arith.addf %24, %47 : vector<8x128xf32>
    %49 = arith.truncf %48 : vector<8x128xf32> to vector<8x128xbf16>
    %c0_22 = arith.constant 0 : index
    %50 = arith.index_cast %33 : i32 to index
    %c0_23 = arith.constant 0 : index
    %c0_24 = arith.constant 0 : index
    %51 = vector.load %arg6[%c0_22, %50, %c0_23, %c0_24] : memref<1x10x8x128xbf16, #tpu.memory_space<vmem>>, vector<1x1x8x128xbf16>
    %52 = vector.shape_cast %51 : vector<1x1x8x128xbf16> to vector<8x128xbf16>
    %53 = vector.shape_cast %49 : vector<8x128xbf16> to vector<1x1x8x128xbf16>
    tpu.vector_store %arg6[%c0_22, %50, %c0_23, %c0_24], %53 {strides = array<i32>} : memref<1x10x8x128xbf16, #tpu.memory_space<vmem>>, vector<1x1x8x128xbf16>,
    %c2_i32_25 = arith.constant 2 : i32
    %c2_i32_26 = arith.constant 2 : i32
    %54 = arith.muli %c2_i32_26, %c2_i32_25 : i32
    %c9_i32_27 = arith.constant 9 : i32
    %55 = arith.subi %c9_i32_27, %54 : i32
    %56 = arith.muli %arg0, %55 : i32
    %57 = arith.addi %c2_i32_25, %56 : i32
    %c0_28 = arith.constant 0 : index
    %58 = arith.index_cast %57 : i32 to index
    %c0_29 = arith.constant 0 : index
    %c0_30 = arith.constant 0 : index
    %59 = vector.load %arg2[%c0_28, %58, %c0_29, %c0_30] : memref<1x10x8x128xbf16, #tpu.memory_space<vmem>>, vector<1x1x8x128xbf16>
    %60 = vector.shape_cast %59 : vector<1x1x8x128xbf16> to vector<8x128xbf16>
    %61 = arith.extf %60 : vector<8x128xbf16> to vector<8x128xf32>
    %62 = arith.truncf %48 : vector<8x128xf32> to vector<8x128xbf16>
    %cst_31 = arith.constant dense<0.000000e+00> : vector<8x128xf32>
    %63 = tpu.matmul %62, %4, %cst_31 {dimension_numbers = #tpu.dot_dimension_numbers<[1], [0], [0], [1], [0, 0, 1, 1], [], []>} : vector<8x128xbf16>, vector<128x128xbf16>, vector<8x128xf32> -> vector<8x128xf32>
    %64 = arith.addf %61, %63 : vector<8x128xf32>
    %65 = math.tanh %64 : vector<8x128xf32>
    %66 = arith.subf %65, %48 : vector<8x128xf32>
    %67 = arith.index_cast %57 : i32 to index
    %c0_32 = arith.constant 0 : index
    %c0_33 = arith.constant 0 : index
    %68 = vector.load %arg3[%67, %c0_32, %c0_33] : memref<10x8x1xf32, #tpu.memory_space<vmem>>, vector<1x8x1xf32>
    %69 = vector.shape_cast %68 : vector<1x8x1xf32> to vector<8x1xf32>
    %70 = vector.broadcast %69 : vector<8x1xf32> to vector<8x128xf32>
    %71 = arith.mulf %66, %70 : vector<8x128xf32>
    %72 = arith.addf %48, %71 : vector<8x128xf32>
    %73 = arith.truncf %72 : vector<8x128xf32> to vector<8x128xbf16>
    %c0_34 = arith.constant 0 : index
    %74 = arith.index_cast %57 : i32 to index
    %c0_35 = arith.constant 0 : index
    %c0_36 = arith.constant 0 : index
    %75 = vector.load %arg6[%c0_34, %74, %c0_35, %c0_36] : memref<1x10x8x128xbf16, #tpu.memory_space<vmem>>, vector<1x1x8x128xbf16>
    %76 = vector.shape_cast %75 : vector<1x1x8x128xbf16> to vector<8x128xbf16>
    %77 = vector.shape_cast %73 : vector<8x128xbf16> to vector<1x1x8x128xbf16>
    tpu.vector_store %arg6[%c0_34, %74, %c0_35, %c0_36], %77 {strides = array<i32>} : memref<1x10x8x128xbf16, #tpu.memory_space<vmem>>, vector<1x1x8x128xbf16>,
    %c3_i32 = arith.constant 3 : i32
    %c2_i32_37 = arith.constant 2 : i32
    %78 = arith.muli %c2_i32_37, %c3_i32 : i32
    %c9_i32_38 = arith.constant 9 : i32
    %79 = arith.subi %c9_i32_38, %78 : i32
    %80 = arith.muli %arg0, %79 : i32
    %81 = arith.addi %c3_i32, %80 : i32
    %c0_39 = arith.constant 0 : index
    %82 = arith.index_cast %81 : i32 to index
    %c0_40 = arith.constant 0 : index
    %c0_41 = arith.constant 0 : index
    %83 = vector.load %arg2[%c0_39, %82, %c0_40, %c0_41] : memref<1x10x8x128xbf16, #tpu.memory_space<vmem>>, vector<1x1x8x128xbf16>
    %84 = vector.shape_cast %83 : vector<1x1x8x128xbf16> to vector<8x128xbf16>
    %85 = arith.extf %84 : vector<8x128xbf16> to vector<8x128xf32>
    %86 = arith.truncf %72 : vector<8x128xf32> to vector<8x128xbf16>
    %cst_42 = arith.constant dense<0.000000e+00> : vector<8x128xf32>
    %87 = tpu.matmul %86, %4, %cst_42 {dimension_numbers = #tpu.dot_dimension_numbers<[1], [0], [0], [1], [0, 0, 1, 1], [], []>} : vector<8x128xbf16>, vector<128x128xbf16>, vector<8x128xf32> -> vector<8x128xf32>
    %88 = arith.addf %85, %87 : vector<8x128xf32>
    %89 = math.tanh %88 : vector<8x128xf32>
    %90 = arith.subf %89, %72 : vector<8x128xf32>
    %91 = arith.index_cast %81 : i32 to index
    %c0_43 = arith.constant 0 : index
    %c0_44 = arith.constant 0 : index
    %92 = vector.load %arg3[%91, %c0_43, %c0_44] : memref<10x8x1xf32, #tpu.memory_space<vmem>>, vector<1x8x1xf32>
    %93 = vector.shape_cast %92 : vector<1x8x1xf32> to vector<8x1xf32>
    %94 = vector.broadcast %93 : vector<8x1xf32> to vector<8x128xf32>
    %95 = arith.mulf %90, %94 : vector<8x128xf32>
    %96 = arith.addf %72, %95 : vector<8x128xf32>
    %97 = arith.truncf %96 : vector<8x128xf32> to vector<8x128xbf16>
    %c0_45 = arith.constant 0 : index
    %98 = arith.index_cast %81 : i32 to index
    %c0_46 = arith.constant 0 : index
    %c0_47 = arith.constant 0 : index
    %99 = vector.load %arg6[%c0_45, %98, %c0_46, %c0_47] : memref<1x10x8x128xbf16, #tpu.memory_space<vmem>>, vector<1x1x8x128xbf16>
    %100 = vector.shape_cast %99 : vector<1x1x8x128xbf16> to vector<8x128xbf16>
    %101 = vector.shape_cast %97 : vector<8x128xbf16> to vector<1x1x8x128xbf16>
    tpu.vector_store %arg6[%c0_45, %98, %c0_46, %c0_47], %101 {strides = array<i32>} : memref<1x10x8x128xbf16, #tpu.memory_space<vmem>>, vector<1x1x8x128xbf16>,
    %c4_i32 = arith.constant 4 : i32
    %c2_i32_48 = arith.constant 2 : i32
    %102 = arith.muli %c2_i32_48, %c4_i32 : i32
    %c9_i32_49 = arith.constant 9 : i32
    %103 = arith.subi %c9_i32_49, %102 : i32
    %104 = arith.muli %arg0, %103 : i32
    %105 = arith.addi %c4_i32, %104 : i32
    %c0_50 = arith.constant 0 : index
    %106 = arith.index_cast %105 : i32 to index
    %c0_51 = arith.constant 0 : index
    %c0_52 = arith.constant 0 : index
    %107 = vector.load %arg2[%c0_50, %106, %c0_51, %c0_52] : memref<1x10x8x128xbf16, #tpu.memory_space<vmem>>, vector<1x1x8x128xbf16>
    %108 = vector.shape_cast %107 : vector<1x1x8x128xbf16> to vector<8x128xbf16>
    %109 = arith.extf %108 : vector<8x128xbf16> to vector<8x128xf32>
    %110 = arith.truncf %96 : vector<8x128xf32> to vector<8x128xbf16>
    %cst_53 = arith.constant dense<0.000000e+00> : vector<8x128xf32>
    %111 = tpu.matmul %110, %4, %cst_53 {dimension_numbers = #tpu.dot_dimension_numbers<[1], [0], [0], [1], [0, 0, 1, 1], [], []>} : vector<8x128xbf16>, vector<128x128xbf16>, vector<8x128xf32> -> vector<8x128xf32>
    %112 = arith.addf %109, %111 : vector<8x128xf32>
    %113 = math.tanh %112 : vector<8x128xf32>
    %114 = arith.subf %113, %96 : vector<8x128xf32>
    %115 = arith.index_cast %105 : i32 to index
    %c0_54 = arith.constant 0 : index
    %c0_55 = arith.constant 0 : index
    %116 = vector.load %arg3[%115, %c0_54, %c0_55] : memref<10x8x1xf32, #tpu.memory_space<vmem>>, vector<1x8x1xf32>
    %117 = vector.shape_cast %116 : vector<1x8x1xf32> to vector<8x1xf32>
    %118 = vector.broadcast %117 : vector<8x1xf32> to vector<8x128xf32>
    %119 = arith.mulf %114, %118 : vector<8x128xf32>
    %120 = arith.addf %96, %119 : vector<8x128xf32>
    %121 = arith.truncf %120 : vector<8x128xf32> to vector<8x128xbf16>
    %c0_56 = arith.constant 0 : index
    %122 = arith.index_cast %105 : i32 to index
    %c0_57 = arith.constant 0 : index
    %c0_58 = arith.constant 0 : index
    %123 = vector.load %arg6[%c0_56, %122, %c0_57, %c0_58] : memref<1x10x8x128xbf16, #tpu.memory_space<vmem>>, vector<1x1x8x128xbf16>
    %124 = vector.shape_cast %123 : vector<1x1x8x128xbf16> to vector<8x128xbf16>
    %125 = vector.shape_cast %121 : vector<8x128xbf16> to vector<1x1x8x128xbf16>
    tpu.vector_store %arg6[%c0_56, %122, %c0_57, %c0_58], %125 {strides = array<i32>} : memref<1x10x8x128xbf16, #tpu.memory_space<vmem>>, vector<1x1x8x128xbf16>,
    %c5_i32 = arith.constant 5 : i32
    %c2_i32_59 = arith.constant 2 : i32
    %126 = arith.muli %c2_i32_59, %c5_i32 : i32
    %c9_i32_60 = arith.constant 9 : i32
    %127 = arith.subi %c9_i32_60, %126 : i32
    %128 = arith.muli %arg0, %127 : i32
    %129 = arith.addi %c5_i32, %128 : i32
    %c0_61 = arith.constant 0 : index
    %130 = arith.index_cast %129 : i32 to index
    %c0_62 = arith.constant 0 : index
    %c0_63 = arith.constant 0 : index
    %131 = vector.load %arg2[%c0_61, %130, %c0_62, %c0_63] : memref<1x10x8x128xbf16, #tpu.memory_space<vmem>>, vector<1x1x8x128xbf16>
    %132 = vector.shape_cast %131 : vector<1x1x8x128xbf16> to vector<8x128xbf16>
    %133 = arith.extf %132 : vector<8x128xbf16> to vector<8x128xf32>
    %134 = arith.truncf %120 : vector<8x128xf32> to vector<8x128xbf16>
    %cst_64 = arith.constant dense<0.000000e+00> : vector<8x128xf32>
    %135 = tpu.matmul %134, %4, %cst_64 {dimension_numbers = #tpu.dot_dimension_numbers<[1], [0], [0], [1], [0, 0, 1, 1], [], []>} : vector<8x128xbf16>, vector<128x128xbf16>, vector<8x128xf32> -> vector<8x128xf32>
    %136 = arith.addf %133, %135 : vector<8x128xf32>
    %137 = math.tanh %136 : vector<8x128xf32>
    %138 = arith.subf %137, %120 : vector<8x128xf32>
    %139 = arith.index_cast %129 : i32 to index
    %c0_65 = arith.constant 0 : index
    %c0_66 = arith.constant 0 : index
    %140 = vector.load %arg3[%139, %c0_65, %c0_66] : memref<10x8x1xf32, #tpu.memory_space<vmem>>, vector<1x8x1xf32>
    %141 = vector.shape_cast %140 : vector<1x8x1xf32> to vector<8x1xf32>
    %142 = vector.broadcast %141 : vector<8x1xf32> to vector<8x128xf32>
    %143 = arith.mulf %138, %142 : vector<8x128xf32>
    %144 = arith.addf %120, %143 : vector<8x128xf32>
    %145 = arith.truncf %144 : vector<8x128xf32> to vector<8x128xbf16>
    %c0_67 = arith.constant 0 : index
    %146 = arith.index_cast %129 : i32 to index
    %c0_68 = arith.constant 0 : index
    %c0_69 = arith.constant 0 : index
    %147 = vector.load %arg6[%c0_67, %146, %c0_68, %c0_69] : memref<1x10x8x128xbf16, #tpu.memory_space<vmem>>, vector<1x1x8x128xbf16>
    %148 = vector.shape_cast %147 : vector<1x1x8x128xbf16> to vector<8x128xbf16>
    %149 = vector.shape_cast %145 : vector<8x128xbf16> to vector<1x1x8x128xbf16>
    tpu.vector_store %arg6[%c0_67, %146, %c0_68, %c0_69], %149 {strides = array<i32>} : memref<1x10x8x128xbf16, #tpu.memory_space<vmem>>, vector<1x1x8x128xbf16>,
    %c6_i32 = arith.constant 6 : i32
    %c2_i32_70 = arith.constant 2 : i32
    %150 = arith.muli %c2_i32_70, %c6_i32 : i32
    %c9_i32_71 = arith.constant 9 : i32
    %151 = arith.subi %c9_i32_71, %150 : i32
    %152 = arith.muli %arg0, %151 : i32
    %153 = arith.addi %c6_i32, %152 : i32
    %c0_72 = arith.constant 0 : index
    %154 = arith.index_cast %153 : i32 to index
    %c0_73 = arith.constant 0 : index
    %c0_74 = arith.constant 0 : index
    %155 = vector.load %arg2[%c0_72, %154, %c0_73, %c0_74] : memref<1x10x8x128xbf16, #tpu.memory_space<vmem>>, vector<1x1x8x128xbf16>
    %156 = vector.shape_cast %155 : vector<1x1x8x128xbf16> to vector<8x128xbf16>
    %157 = arith.extf %156 : vector<8x128xbf16> to vector<8x128xf32>
    %158 = arith.truncf %144 : vector<8x128xf32> to vector<8x128xbf16>
    %cst_75 = arith.constant dense<0.000000e+00> : vector<8x128xf32>
    %159 = tpu.matmul %158, %4, %cst_75 {dimension_numbers = #tpu.dot_dimension_numbers<[1], [0], [0], [1], [0, 0, 1, 1], [], []>} : vector<8x128xbf16>, vector<128x128xbf16>, vector<8x128xf32> -> vector<8x128xf32>
    %160 = arith.addf %157, %159 : vector<8x128xf32>
    %161 = math.tanh %160 : vector<8x128xf32>
    %162 = arith.subf %161, %144 : vector<8x128xf32>
    %163 = arith.index_cast %153 : i32 to index
    %c0_76 = arith.constant 0 : index
    %c0_77 = arith.constant 0 : index
    %164 = vector.load %arg3[%163, %c0_76, %c0_77] : memref<10x8x1xf32, #tpu.memory_space<vmem>>, vector<1x8x1xf32>
    %165 = vector.shape_cast %164 : vector<1x8x1xf32> to vector<8x1xf32>
    %166 = vector.broadcast %165 : vector<8x1xf32> to vector<8x128xf32>
    %167 = arith.mulf %162, %166 : vector<8x128xf32>
    %168 = arith.addf %144, %167 : vector<8x128xf32>
    %169 = arith.truncf %168 : vector<8x128xf32> to vector<8x128xbf16>
    %c0_78 = arith.constant 0 : index
    %170 = arith.index_cast %153 : i32 to index
    %c0_79 = arith.constant 0 : index
    %c0_80 = arith.constant 0 : index
    %171 = vector.load %arg6[%c0_78, %170, %c0_79, %c0_80] : memref<1x10x8x128xbf16, #tpu.memory_space<vmem>>, vector<1x1x8x128xbf16>
    %172 = vector.shape_cast %171 : vector<1x1x8x128xbf16> to vector<8x128xbf16>
    %173 = vector.shape_cast %169 : vector<8x128xbf16> to vector<1x1x8x128xbf16>
    tpu.vector_store %arg6[%c0_78, %170, %c0_79, %c0_80], %173 {strides = array<i32>} : memref<1x10x8x128xbf16, #tpu.memory_space<vmem>>, vector<1x1x8x128xbf16>,
    %c7_i32 = arith.constant 7 : i32
    %c2_i32_81 = arith.constant 2 : i32
    %174 = arith.muli %c2_i32_81, %c7_i32 : i32
    %c9_i32_82 = arith.constant 9 : i32
    %175 = arith.subi %c9_i32_82, %174 : i32
    %176 = arith.muli %arg0, %175 : i32
    %177 = arith.addi %c7_i32, %176 : i32
    %c0_83 = arith.constant 0 : index
    %178 = arith.index_cast %177 : i32 to index
    %c0_84 = arith.constant 0 : index
    %c0_85 = arith.constant 0 : index
    %179 = vector.load %arg2[%c0_83, %178, %c0_84, %c0_85] : memref<1x10x8x128xbf16, #tpu.memory_space<vmem>>, vector<1x1x8x128xbf16>
    %180 = vector.shape_cast %179 : vector<1x1x8x128xbf16> to vector<8x128xbf16>
    %181 = arith.extf %180 : vector<8x128xbf16> to vector<8x128xf32>
    %182 = arith.truncf %168 : vector<8x128xf32> to vector<8x128xbf16>
    %cst_86 = arith.constant dense<0.000000e+00> : vector<8x128xf32>
    %183 = tpu.matmul %182, %4, %cst_86 {dimension_numbers = #tpu.dot_dimension_numbers<[1], [0], [0], [1], [0, 0, 1, 1], [], []>} : vector<8x128xbf16>, vector<128x128xbf16>, vector<8x128xf32> -> vector<8x128xf32>
    %184 = arith.addf %181, %183 : vector<8x128xf32>
    %185 = math.tanh %184 : vector<8x128xf32>
    %186 = arith.subf %185, %168 : vector<8x128xf32>
    %187 = arith.index_cast %177 : i32 to index
    %c0_87 = arith.constant 0 : index
    %c0_88 = arith.constant 0 : index
    %188 = vector.load %arg3[%187, %c0_87, %c0_88] : memref<10x8x1xf32, #tpu.memory_space<vmem>>, vector<1x8x1xf32>
    %189 = vector.shape_cast %188 : vector<1x8x1xf32> to vector<8x1xf32>
    %190 = vector.broadcast %189 : vector<8x1xf32> to vector<8x128xf32>
    %191 = arith.mulf %186, %190 : vector<8x128xf32>
    %192 = arith.addf %168, %191 : vector<8x128xf32>
    %193 = arith.truncf %192 : vector<8x128xf32> to vector<8x128xbf16>
    %c0_89 = arith.constant 0 : index
    %194 = arith.index_cast %177 : i32 to index
    %c0_90 = arith.constant 0 : index
    %c0_91 = arith.constant 0 : index
    %195 = vector.load %arg6[%c0_89, %194, %c0_90, %c0_91] : memref<1x10x8x128xbf16, #tpu.memory_space<vmem>>, vector<1x1x8x128xbf16>
    %196 = vector.shape_cast %195 : vector<1x1x8x128xbf16> to vector<8x128xbf16>
    %197 = vector.shape_cast %193 : vector<8x128xbf16> to vector<1x1x8x128xbf16>
    tpu.vector_store %arg6[%c0_89, %194, %c0_90, %c0_91], %197 {strides = array<i32>} : memref<1x10x8x128xbf16, #tpu.memory_space<vmem>>, vector<1x1x8x128xbf16>,
    %c8_i32 = arith.constant 8 : i32
    %c2_i32_92 = arith.constant 2 : i32
    %198 = arith.muli %c2_i32_92, %c8_i32 : i32
    %c9_i32_93 = arith.constant 9 : i32
    %199 = arith.subi %c9_i32_93, %198 : i32
    %200 = arith.muli %arg0, %199 : i32
    %201 = arith.addi %c8_i32, %200 : i32
    %c0_94 = arith.constant 0 : index
    %202 = arith.index_cast %201 : i32 to index
    %c0_95 = arith.constant 0 : index
    %c0_96 = arith.constant 0 : index
    %203 = vector.load %arg2[%c0_94, %202, %c0_95, %c0_96] : memref<1x10x8x128xbf16, #tpu.memory_space<vmem>>, vector<1x1x8x128xbf16>
    %204 = vector.shape_cast %203 : vector<1x1x8x128xbf16> to vector<8x128xbf16>
    %205 = arith.extf %204 : vector<8x128xbf16> to vector<8x128xf32>
    %206 = arith.truncf %192 : vector<8x128xf32> to vector<8x128xbf16>
    %cst_97 = arith.constant dense<0.000000e+00> : vector<8x128xf32>
    %207 = tpu.matmul %206, %4, %cst_97 {dimension_numbers = #tpu.dot_dimension_numbers<[1], [0], [0], [1], [0, 0, 1, 1], [], []>} : vector<8x128xbf16>, vector<128x128xbf16>, vector<8x128xf32> -> vector<8x128xf32>
    %208 = arith.addf %205, %207 : vector<8x128xf32>
    %209 = math.tanh %208 : vector<8x128xf32>
    %210 = arith.subf %209, %192 : vector<8x128xf32>
    %211 = arith.index_cast %201 : i32 to index
    %c0_98 = arith.constant 0 : index
    %c0_99 = arith.constant 0 : index
    %212 = vector.load %arg3[%211, %c0_98, %c0_99] : memref<10x8x1xf32, #tpu.memory_space<vmem>>, vector<1x8x1xf32>
    %213 = vector.shape_cast %212 : vector<1x8x1xf32> to vector<8x1xf32>
    %214 = vector.broadcast %213 : vector<8x1xf32> to vector<8x128xf32>
    %215 = arith.mulf %210, %214 : vector<8x128xf32>
    %216 = arith.addf %192, %215 : vector<8x128xf32>
    %217 = arith.truncf %216 : vector<8x128xf32> to vector<8x128xbf16>
    %c0_100 = arith.constant 0 : index
    %218 = arith.index_cast %201 : i32 to index
    %c0_101 = arith.constant 0 : index
    %c0_102 = arith.constant 0 : index
    %219 = vector.load %arg6[%c0_100, %218, %c0_101, %c0_102] : memref<1x10x8x128xbf16, #tpu.memory_space<vmem>>, vector<1x1x8x128xbf16>
    %220 = vector.shape_cast %219 : vector<1x1x8x128xbf16> to vector<8x128xbf16>
    %221 = vector.shape_cast %217 : vector<8x128xbf16> to vector<1x1x8x128xbf16>
    tpu.vector_store %arg6[%c0_100, %218, %c0_101, %c0_102], %221 {strides = array<i32>} : memref<1x10x8x128xbf16, #tpu.memory_space<vmem>>, vector<1x1x8x128xbf16>,
    %c9_i32_103 = arith.constant 9 : i32
    %c2_i32_104 = arith.constant 2 : i32
    %222 = arith.muli %c2_i32_104, %c9_i32_103 : i32
    %c9_i32_105 = arith.constant 9 : i32
    %223 = arith.subi %c9_i32_105, %222 : i32
    %224 = arith.muli %arg0, %223 : i32
    %225 = arith.addi %c9_i32_103, %224 : i32
    %c0_106 = arith.constant 0 : index
    %226 = arith.index_cast %225 : i32 to index
    %c0_107 = arith.constant 0 : index
    %c0_108 = arith.constant 0 : index
    %227 = vector.load %arg2[%c0_106, %226, %c0_107, %c0_108] : memref<1x10x8x128xbf16, #tpu.memory_space<vmem>>, vector<1x1x8x128xbf16>
    %228 = vector.shape_cast %227 : vector<1x1x8x128xbf16> to vector<8x128xbf16>
    %229 = arith.extf %228 : vector<8x128xbf16> to vector<8x128xf32>
    %230 = arith.truncf %216 : vector<8x128xf32> to vector<8x128xbf16>
    %cst_109 = arith.constant dense<0.000000e+00> : vector<8x128xf32>
    %231 = tpu.matmul %230, %4, %cst_109 {dimension_numbers = #tpu.dot_dimension_numbers<[1], [0], [0], [1], [0, 0, 1, 1], [], []>} : vector<8x128xbf16>, vector<128x128xbf16>, vector<8x128xf32> -> vector<8x128xf32>
    %232 = arith.addf %229, %231 : vector<8x128xf32>
    %233 = math.tanh %232 : vector<8x128xf32>
    %234 = arith.subf %233, %216 : vector<8x128xf32>
    %235 = arith.index_cast %225 : i32 to index
    %c0_110 = arith.constant 0 : index
    %c0_111 = arith.constant 0 : index
    %236 = vector.load %arg3[%235, %c0_110, %c0_111] : memref<10x8x1xf32, #tpu.memory_space<vmem>>, vector<1x8x1xf32>
    %237 = vector.shape_cast %236 : vector<1x8x1xf32> to vector<8x1xf32>
    %238 = vector.broadcast %237 : vector<8x1xf32> to vector<8x128xf32>
    %239 = arith.mulf %234, %238 : vector<8x128xf32>
    %240 = arith.addf %216, %239 : vector<8x128xf32>
    %241 = arith.truncf %240 : vector<8x128xf32> to vector<8x128xbf16>
    %c0_112 = arith.constant 0 : index
    %242 = arith.index_cast %225 : i32 to index
    %c0_113 = arith.constant 0 : index
    %c0_114 = arith.constant 0 : index
    %243 = vector.load %arg6[%c0_112, %242, %c0_113, %c0_114] : memref<1x10x8x128xbf16, #tpu.memory_space<vmem>>, vector<1x1x8x128xbf16>
    %244 = vector.shape_cast %243 : vector<1x1x8x128xbf16> to vector<8x128xbf16>
    %245 = vector.shape_cast %241 : vector<8x128xbf16> to vector<1x1x8x128xbf16>
    tpu.vector_store %arg6[%c0_112, %242, %c0_113, %c0_114], %245 {strides = array<i32>} : memref<1x10x8x128xbf16, #tpu.memory_space<vmem>>, vector<1x1x8x128xbf16>,
    %c10_i32 = arith.constant 10 : i32
    %c0_115 = arith.constant 0 : index
    %c0_116 = arith.constant 0 : index
    %246 = vector.load %arg7[%c0_115, %c0_116] : memref<8x128xf32, #tpu.memory_space<vmem>>, vector<8x128xf32>
    tpu.vector_store %arg7[%c0_115, %c0_116], %240 {strides = array<i32>} : memref<8x128xf32, #tpu.memory_space<vmem>>, vector<8x128xf32>,
    return
  }
  func.func @transform_0(%arg0: i32, %arg1: i32) -> (i32, i32, i32, i32) {
    %c2_i32 = arith.constant 2 : i32
    %0 = arith.muli %c2_i32, %arg1 : i32
    %c0_i32 = arith.constant 0 : i32
    %1 = arith.subi %c0_i32, %0 : i32
    %2 = arith.muli %arg0, %1 : i32
    %3 = arith.addi %arg1, %2 : i32
    %c0_i32_0 = arith.constant 0 : i32
    %c0_i32_1 = arith.constant 0 : i32
    %c0_i32_2 = arith.constant 0 : i32
    return %arg0, %3, %c0_i32_0, %c0_i32_1 : i32, i32, i32, i32
  }
  func.func @transform_1(%arg0: i32, %arg1: i32) -> (i32, i32, i32) {
    %c2_i32 = arith.constant 2 : i32
    %0 = arith.muli %c2_i32, %arg1 : i32
    %c0_i32 = arith.constant 0 : i32
    %1 = arith.subi %c0_i32, %0 : i32
    %2 = arith.muli %arg0, %1 : i32
    %3 = arith.addi %arg1, %2 : i32
    %c0_i32_0 = arith.constant 0 : i32
    %c0_i32_1 = arith.constant 0 : i32
    %c0_i32_2 = arith.constant 0 : i32
    return %3, %c0_i32_0, %c0_i32_1 : i32, i32, i32
  }
  func.func @transform_2(%arg0: i32, %arg1: i32) -> (i32, i32, i32) {
    %c0_i32 = arith.constant 0 : i32
    %c0_i32_0 = arith.constant 0 : i32
    %c0_i32_1 = arith.constant 0 : i32
    return %arg0, %c0_i32, %c0_i32_0 : i32, i32, i32
  }
  func.func @transform_3(%arg0: i32, %arg1: i32) -> (i32, i32, i32) {
    %c0_i32 = arith.constant 0 : i32
    %c0_i32_0 = arith.constant 0 : i32
    %c0_i32_1 = arith.constant 0 : i32
    return %arg0, %c0_i32, %c0_i32_0 : i32, i32, i32
  }
  func.func @transform_4(%arg0: i32, %arg1: i32) -> (i32, i32, i32, i32) {
    %c2_i32 = arith.constant 2 : i32
    %0 = arith.muli %c2_i32, %arg1 : i32
    %c0_i32 = arith.constant 0 : i32
    %1 = arith.subi %c0_i32, %0 : i32
    %2 = arith.muli %arg0, %1 : i32
    %3 = arith.addi %arg1, %2 : i32
    %c0_i32_0 = arith.constant 0 : i32
    %c0_i32_1 = arith.constant 0 : i32
    %c0_i32_2 = arith.constant 0 : i32
    return %arg0, %3, %c0_i32_0, %c0_i32_1 : i32, i32, i32, i32
  }
}

</mosaic_0001>

<llo_original>
// kernel: tpu_custom_call.1
$region0: #{tpu_custom_call.1}
  #allocation0 [shape = 'u32[]', space=smem, size = 0x4, offset = 0x4, fixed_abs, tag = 'smem constant byte address 0x4 - core index']
  #allocation1 [shape = 'u32[144,128]{1,0:T(1,128)}', space=vmem, size = 0x12000, scoped, tag = 'internal scratch']
  #allocation2 [shape = 'f32[8,128]{1,0:T(8,128)}', space=vmem, size = 0x1000, scoped, tag = 'scratch operand']
  %s0 = inlined_call_operand.vmem [shape: bf16[2,10,8,128], index: 0, kind: input, shape index: {}]
  %s1 = inlined_call_operand.vmem [shape: f32[10,8,1], index: 1, kind: input, shape index: {}]
  %s2 = inlined_call_operand.hbm [shape: f32[2,8,128], index: 2, kind: input, shape index: {}]
  %s3 = inlined_call_operand.hbm [shape: bf16[2,128,128], index: 3, kind: input, shape index: {}]
  %s4 = inlined_call_operand.hbm [shape: bf16[2,10,8,128], index: 4, kind: output, shape index: {}]
  %s5 = sld [smem:[#allocation0]]
  $region61: #{tpu_custom_call.1} parent=0
    _
  %s7 = ssub.s32 1, %s5
  %s8 = scalar_select 0, %s7, %s5
  $region1: #{tpu_custom_call.1} parent=0
    #allocation3 [shape = 'u8[8192]{0}', space=vmem, size = 0x2000, scoped, tag = 'input window, operand 2']
    #allocation4 [shape = 's32[2]{0}', space=sflag, size = 0x8, scoped, tag = 'scoped memory for tpu_custom_call.1']
    #allocation5 [shape = 's32[2]{0}', space=sflag, size = 0x8, scoped, tag = 'scoped memory for tpu_custom_call.1']
    #allocation6 [shape = 'u8[65536]{0}', space=vmem, size = 0x10000, scoped, tag = 'input window, operand 3']
    #allocation7 [shape = 's32[2]{0}', space=sflag, size = 0x8, scoped, tag = 'scoped memory for tpu_custom_call.1']
    #allocation8 [shape = 'u8[40960]{0}', space=vmem, size = 0xa000, scoped, tag = 'output window, operand 0']
    %9 = vsyncpa [#allocation4], 0
    %s10 = scalar_lea.sflag [#allocation4], 1
    %11 = vsyncpa %s10, 0
    %12 = vsyncpa [#allocation7], 0
    %s13 = scalar_lea.sflag [#allocation7], 1
    %14 = vsyncpa %s13, 0
    %15 = vsyncpa [#allocation5], 0
    %s16 = scalar_lea.sflag [#allocation5], 1
    %17 = vsyncpa %s16, 0
    loop: start=0, step=1, limit=4
    $region2: #{tpu_custom_call.1} parent=1 // loop_pre_header
      _
    $region3: #{tpu_custom_call.1} parent=1 // loop_header
      %s19 = sphi 0, %s23
      %p20 = scmp.ge.s32.totalorder %s19, 4
      %s26 = sphi 0, %s38
      %s27 = sphi 0, %s34
      %s28 = sphi 0, %s26
      %s29 = sphi 0, %s27
      %s30 = sphi 0, %s28
      %s31 = sphi 0, %s29
      %s51 = sphi 0, %s53
      %s54 = sphi 0, %s51
      %s55 = sphi 0, %s54
      %s71 = sphi 0, %s55
      %s85 = sphi 0, %s87
      %s88 = sphi 0, %s85
      %s89 = sphi 0, %s88
      %s105 = sphi 0, %s89
      %s111 = sphi 0, %s113
      %s114 = sphi 0, %s111
      %s115 = sphi 0, %s114
      %s131 = sphi 0, %s115
      %s137 = sphi 0, %s139
      %s140 = sphi 0, %s137
      %s141 = sphi 0, %s140
      %s157 = sphi 0, %s141
      %s173 = sphi 0, %s175
      %s176 = sphi 0, %s173
      %s177 = sphi 0, %s176
      %s193 = sphi 0, %s177
    $region4: #{tpu_custom_call.1} parent=1 // loop_header_branch
      %22 = sbr.rel (%p20) target = $region8
    $region5: #{tpu_custom_call.1} parent=1 // loop_body
      %s24 = ssub.s32 %s19, 1
      %s25 = ssub.s32 %s19, 2
      %s32 = sadd.s32 1, %s27
      %p33 = scmp.ge.s32.totalorder %s32, 1
      %s34 = scalar_select %p33, 0, %s32
      %s35 = sadd.s32 1, %s26
      %s36 = scalar_select %p33, %s35, %s26
      %p37 = scmp.ge.s32.totalorder %s36, 2
      %s38 = scalar_select %p37, 0, %s36
      %s39 = smul.u32 %s27, 2
      %s40 = ssub.s32 0, %s39
      %s41 = smul.u32 %s26, %s40
      %s42 = sadd.s32 %s27, %s41
      %s43 = smul.u32 %s34, 2
      %s44 = ssub.s32 0, %s43
      %s45 = smul.u32 %s38, %s44
      %s46 = sadd.s32 %s34, %s45
      %s47 = ssub.s32 %s26, %s38
      %s48 = ssub.s32 %s42, %s46
      %s49 = sor.u32 %s47, %s48
      %p50 = scmp.eq.s32.totalorder %s49, 0
      %s52 = sadd.s32 %s51, 1
      %s53 = scalar_select %p50, %s51, %s52
      %p56 = pneg %p50
      %p57 = scmp.eq.s32.totalorder %s19, 1
      %p58 = por %p56, %p57
      %p59 = scmp.ne.s32.totalorder %s51, %s54
      %p60 = scmp.eq.s32.totalorder %s19, 0
      %p61 = por %p59, %p60
      %p62 = scmp.ne.s32.totalorder %s51, %s54
      %p63 = scmp.eq.s32.totalorder %s24, 1
      %p64 = por %p62, %p63
      %p65 = scmp.ne.s32.totalorder %s54, %s55
      %p66 = scmp.eq.s32.totalorder %s24, 0
      %p67 = por %p65, %p66
      %p68 = scmp.ne.s32.totalorder %s54, %s55
      %p69 = scmp.eq.s32.totalorder %s25, 1
      %p70 = por %p68, %p69
      %p72 = scmp.ne.s32.totalorder %s55, %s71
      %p73 = scmp.eq.s32.totalorder %s25, 0
      %p74 = por %p72, %p73
      %s75 = smul.u32 %s27, 2
      %s76 = ssub.s32 0, %s75
      %s77 = smul.u32 %s26, %s76
      %s78 = sadd.s32 %s27, %s77
      %s79 = smul.u32 %s34, 2
      %s80 = ssub.s32 0, %s79
      %s81 = smul.u32 %s38, %s80
      %s82 = sadd.s32 %s34, %s81
      %s83 = ssub.s32 %s78, %s82
      %p84 = scmp.eq.s32.totalorder %s83, 0
      %s86 = sadd.s32 %s85, 1
      %s87 = scalar_select %p84, %s85, %s86
      %p90 = pneg %p84
      %p91 = scmp.eq.s32.totalorder %s19, 1
      %p92 = por %p90, %p91
      %p93 = scmp.ne.s32.totalorder %s85, %s88
      %p94 = scmp.eq.s32.totalorder %s19, 0
      %p95 = por %p93, %p94
      %p96 = scmp.ne.s32.totalorder %s85, %s88
      %p97 = scmp.eq.s32.totalorder %s24, 1
      %p98 = por %p96, %p97
      %p99 = scmp.ne.s32.totalorder %s88, %s89
      %p100 = scmp.eq.s32.totalorder %s24, 0
      %p101 = por %p99, %p100
      %p102 = scmp.ne.s32.totalorder %s88, %s89
      %p103 = scmp.eq.s32.totalorder %s25, 1
      %p104 = por %p102, %p103
      %p106 = scmp.ne.s32.totalorder %s89, %s105
      %p107 = scmp.eq.s32.totalorder %s25, 0
      %p108 = por %p106, %p107
      %s109 = ssub.s32 %s26, %s38
      %p110 = scmp.eq.s32.totalorder %s109, 0
      %s112 = sadd.s32 %s111, 1
      %s113 = scalar_select %p110, %s111, %s112
      %p116 = pneg %p110
      %p117 = scmp.eq.s32.totalorder %s19, 1
      %p118 = por %p116, %p117
      %p119 = scmp.ne.s32.totalorder %s111, %s114
      %p120 = scmp.eq.s32.totalorder %s19, 0
      %p121 = por %p119, %p120
      %p122 = scmp.ne.s32.totalorder %s111, %s114
      %p123 = scmp.eq.s32.totalorder %s24, 1
      %p124 = por %p122, %p123
      %p125 = scmp.ne.s32.totalorder %s114, %s115
      %p126 = scmp.eq.s32.totalorder %s24, 0
      %p127 = por %p125, %p126
      %p128 = scmp.ne.s32.totalorder %s114, %s115
      %p129 = scmp.eq.s32.totalorder %s25, 1
      %p130 = por %p128, %p129
      %p132 = scmp.ne.s32.totalorder %s115, %s131
      %p133 = scmp.eq.s32.totalorder %s25, 0
      %p134 = por %p132, %p133
      %s135 = ssub.s32 %s26, %s38
      %p136 = scmp.eq.s32.totalorder %s135, 0
      %s138 = sadd.s32 %s137, 1
      %s139 = scalar_select %p136, %s137, %s138
      %p142 = pneg %p136
      %p143 = scmp.eq.s32.totalorder %s19, 1
      %p144 = por %p142, %p143
      %p145 = scmp.ne.s32.totalorder %s137, %s140
      %p146 = scmp.eq.s32.totalorder %s19, 0
      %p147 = por %p145, %p146
      %p148 = scmp.ne.s32.totalorder %s137, %s140
      %p149 = scmp.eq.s32.totalorder %s24, 1
      %p150 = por %p148, %p149
      %p151 = scmp.ne.s32.totalorder %s140, %s141
      %p152 = scmp.eq.s32.totalorder %s24, 0
      %p153 = por %p151, %p152
      %p154 = scmp.ne.s32.totalorder %s140, %s141
      %p155 = scmp.eq.s32.totalorder %s25, 1
      %p156 = por %p154, %p155
      %p158 = scmp.ne.s32.totalorder %s141, %s157
      %p159 = scmp.eq.s32.totalorder %s25, 0
      %p160 = por %p158, %p159
      %s161 = smul.u32 %s27, 2
      %s162 = ssub.s32 0, %s161
      %s163 = smul.u32 %s26, %s162
      %s164 = sadd.s32 %s27, %s163
      %s165 = smul.u32 %s34, 2
      %s166 = ssub.s32 0, %s165
      %s167 = smul.u32 %s38, %s166
      %s168 = sadd.s32 %s34, %s167
      %s169 = ssub.s32 %s26, %s38
      %s170 = ssub.s32 %s164, %s168
      %s171 = sor.u32 %s169, %s170
      %p172 = scmp.eq.s32.totalorder %s171, 0
      %s174 = sadd.s32 %s173, 1
      %s175 = scalar_select %p172, %s173, %s174
      %p178 = pneg %p172
      %p179 = scmp.eq.s32.totalorder %s19, 1
      %p180 = por %p178, %p179
      %p181 = scmp.ne.s32.totalorder %s173, %s176
      %p182 = scmp.eq.s32.totalorder %s19, 0
      %p183 = por %p181, %p182
      %p184 = scmp.ne.s32.totalorder %s173, %s176
      %p185 = scmp.eq.s32.totalorder %s24, 1
      %p186 = por %p184, %p185
      %p187 = scmp.ne.s32.totalorder %s176, %s177
      %p188 = scmp.eq.s32.totalorder %s24, 0
      %p189 = por %p187, %p188
      %p190 = scmp.ne.s32.totalorder %s176, %s177
      %p191 = scmp.eq.s32.totalorder %s25, 1
      %p192 = por %p190, %p191
      %p194 = scmp.ne.s32.totalorder %s177, %s193
      %p195 = scmp.eq.s32.totalorder %s25, 0
      %p196 = por %p194, %p195
      %p197 = scmp.le.s32.totalorder 1, %s19
      %p198 = scmp.lt.s32.totalorder %s19, 3
      %p199 = pnand %p197, %p198
      %p200 = pneg %p199
      // Predicated region
      $region9: #{tpu_custom_call.1} parent=5 // pred_check
        _
      $region10: #{tpu_custom_call.1} parent=5 // pred_check_branch
        %202 = sbr.rel (%p199) target = $region12
      $region11: #{tpu_custom_call.1} parent=5 // pred_region
        %s203 = ssub.s32 %s19, 1
      $region12: #{tpu_custom_call.1} parent=5 // pred_fallthru
        _
      %p204 = scmp.lt.s32.totalorder %s19, 2
      // Predicated region
      $region13: #{tpu_custom_call.1} parent=5 // pred_check
        %p205 = pneg %p204
      $region14: #{tpu_custom_call.1} parent=5 // pred_check_branch
        %207 = sbr.rel (%p205) target = $region16
      $region15: #{tpu_custom_call.1} parent=5 // pred_region
        // Predicated region
        $region17: #{tpu_custom_call.1} parent=15 // pred_check
          %p208 = pneg %p61
        $region18: #{tpu_custom_call.1} parent=15 // pred_check_branch
          %210 = sbr.rel (%p208) target = $region20
        $region19: #{tpu_custom_call.1} parent=15 // pred_region
          %s211 = smul.u32 %s27, 2
          %s212 = ssub.s32 0, %s211
          %s213 = smul.u32 %s26, %s212
          %s214 = sadd.s32 %s27, %s213
          %s215 = smul.u32 10, %s214
          %p216 = scmp.lt.s32.totalorder %s26, 1
          %s217 = scalar_select %p216, %s26, 1
          %p218 = scmp.lt.s32.totalorder %s215, 9
          %s219 = scalar_select %p218, %s215, 9
          %s220 = smul.addr %s217, 10
          %s221 = sadd.s32 %s219, %s220
          %s222 = smul.addr %s221, 4
          %s223 = scalar_lea.vmem %s0, %s222
          %s224 = smul.u32 %s27, 2
          %s225 = ssub.s32 0, %s224
          %s226 = smul.u32 %s26, %s225
          %s227 = sadd.s32 %s27, %s226
          %s228 = smul.u32 10, %s227
        $region20: #{tpu_custom_call.1} parent=15 // pred_fallthru
          _
        // Predicated region
        $region21: #{tpu_custom_call.1} parent=15 // pred_check
          %p229 = pneg %p95
        $region22: #{tpu_custom_call.1} parent=15 // pred_check_branch
          %231 = sbr.rel (%p229) target = $region24
        $region23: #{tpu_custom_call.1} parent=15 // pred_region
          %s232 = smul.u32 %s27, 2
          %s233 = ssub.s32 0, %s232
          %s234 = smul.u32 %s26, %s233
          %s235 = sadd.s32 %s27, %s234
          %s236 = smul.u32 10, %s235
          %p237 = scmp.lt.s32.totalorder %s236, 9
          %s238 = scalar_select %p237, %s236, 9
          %s239 = smul.addr %s238, 8
          %s240 = scalar_lea.vmem %s1, %s239
          %s241 = smul.u32 %s27, 2
          %s242 = ssub.s32 0, %s241
          %s243 = smul.u32 %s26, %s242
          %s244 = sadd.s32 %s27, %s243
          %s245 = smul.u32 10, %s244
        $region24: #{tpu_custom_call.1} parent=15 // pred_fallthru
          _
        // Predicated region
        $region25: #{tpu_custom_call.1} parent=15 // pred_check
          %p246 = pneg %p121
        $region26: #{tpu_custom_call.1} parent=15 // pred_check_branch
          %248 = sbr.rel (%p246) target = $region28
        $region27: #{tpu_custom_call.1} parent=15 // pred_region
          %s249 = sand.u32 %s111, 1
          %s250 = scalar_lea.sflag [#allocation4], %s249
          %s251 = sand.u32 %s111, 1
          %s252 = smul.addr %s251, 8
          %s253 = scalar_lea.vmem [#allocation3], %s252
          %s255 = ssub.s32 128, 128
          %256 = vsyncadd %s250, %s255
          %s257 = smul.addr %s26, 128
          %s258 = scalar_lea.hbm %s2, %s257
          %s260 = sshll.u32 %s253, 4
          %s261 = int_to_ptr.vmem [resolvable:$true] %s260
          %263 = dma.hbm_to_vmem [thread:$0]  %s258, 128, %s261, %s250
        $region28: #{tpu_custom_call.1} parent=15 // pred_fallthru
          _
        // Predicated region
        $region29: #{tpu_custom_call.1} parent=15 // pred_check
          %p264 = pneg %p147
        $region30: #{tpu_custom_call.1} parent=15 // pred_check_branch
          %266 = sbr.rel (%p264) target = $region32
        $region31: #{tpu_custom_call.1} parent=15 // pred_region
          %s267 = sand.u32 %s137, 1
          %s268 = scalar_lea.sflag [#allocation7], %s267
          %s269 = sand.u32 %s137, 1
          %s270 = smul.addr %s269, 64
          %s271 = scalar_lea.vmem [#allocation6], %s270
          %s273 = ssub.s32 1024, 1024
          %274 = vsyncadd %s268, %s273
          %s275 = smul.addr %s26, 16
          %s276 = smul.addr %s275, 64
          %s277 = scalar_lea.hbm %s3, %s276
          %s278 = sshll.u32 %s271, 4
          %s279 = int_to_ptr.vmem [resolvable:$true] %s278
          %284 = dma.hbm_to_vmem [thread:$0]  %s277, 1024, %s279, %s268, 64, 64, 4
        $region32: #{tpu_custom_call.1} parent=15 // pred_fallthru
          _
      $region16: #{tpu_custom_call.1} parent=5 // pred_fallthru
        _
      %p285 = scmp.le.s32.totalorder 1, %s19
      %p286 = scmp.lt.s32.totalorder %s19, 3
      %p287 = pnand %p285, %p286
      %p288 = pneg %p287
      // Predicated region
      $region33: #{tpu_custom_call.1} parent=5 // pred_check
        _
      $region34: #{tpu_custom_call.1} parent=5 // pred_check_branch
        %290 = sbr.rel (%p287) target = $region36
      $region35: #{tpu_custom_call.1} parent=5 // pred_region
        %s291 = ssub.s32 %s19, 1
        %s292 = sand.u32 %s114, 1
        %s293 = scalar_lea.sflag [#allocation4], %s292
        %s294 = sand.u32 %s114, 1
        %s295 = smul.addr %s294, 8
        %s296 = scalar_lea.vmem [#allocation3], %s295
        // Predicated region
        $region37: #{tpu_custom_call.1} parent=35 // pred_check
          %p297 = pneg %p127
        $region38: #{tpu_custom_call.1} parent=35 // pred_check_branch
          %299 = sbr.rel (%p297) target = $region40
        $region39: #{tpu_custom_call.1} parent=35 // pred_region
          %300 = dma.done %s293, 128
        $region40: #{tpu_custom_call.1} parent=35 // pred_fallthru
          _
        %s301 = sand.u32 %s140, 1
        %s302 = scalar_lea.sflag [#allocation7], %s301
        %s303 = sand.u32 %s140, 1
        %s304 = smul.addr %s303, 64
        %s305 = scalar_lea.vmem [#allocation6], %s304
        // Predicated region
        $region41: #{tpu_custom_call.1} parent=35 // pred_check
          %p306 = pneg %p153
        $region42: #{tpu_custom_call.1} parent=35 // pred_check_branch
          %308 = sbr.rel (%p306) target = $region44
        $region43: #{tpu_custom_call.1} parent=35 // pred_region
          %309 = dma.done %s302, 1024
        $region44: #{tpu_custom_call.1} parent=35 // pred_fallthru
          _
        %s310 = smul.u32 %s29, 2
        %s311 = ssub.s32 0, %s310
        %s312 = smul.u32 %s28, %s311
        %s313 = sadd.s32 %s29, %s312
        %s314 = smul.u32 10, %s313
        %p315 = scmp.lt.s32.totalorder %s28, 1
        %s316 = scalar_select %p315, %s28, 1
        %p317 = scmp.lt.s32.totalorder %s314, 9
        %s318 = scalar_select %p317, %s314, 9
        %s319 = smul.addr %s316, 10
        %s320 = sadd.s32 %s318, %s319
        %s321 = smul.addr %s320, 4
        %s322 = scalar_lea.vmem %s0, %s321
        %p323 = pneg %p67
        %p324 = pneg %p64
        %s325 = smul.u32 %s29, 2
        %s326 = ssub.s32 0, %s325
        %s327 = smul.u32 %s28, %s326
        %s328 = sadd.s32 %s29, %s327
        %s329 = smul.u32 10, %s328
        %p330 = scmp.lt.s32.totalorder %s329, 9
        %s331 = scalar_select %p330, %s329, 9
        %s332 = smul.addr %s331, 8
        %s333 = scalar_lea.vmem %s1, %s332
        %p334 = pneg %p101
        %p335 = pneg %p98
        %s336 = sand.u32 %s114, 1
        %s337 = scalar_lea.sflag [#allocation4], %s336
        %s338 = sand.u32 %s114, 1
        %s339 = smul.addr %s338, 8
        %s340 = scalar_lea.vmem [#allocation3], %s339
        %p341 = pneg %p127
        %p342 = pneg %p124
        %s343 = sand.u32 %s140, 1
        %s344 = scalar_lea.sflag [#allocation7], %s343
        %s345 = sand.u32 %s140, 1
        %s346 = smul.addr %s345, 64
        %s347 = scalar_lea.vmem [#allocation6], %s346
        %p348 = pneg %p153
        %p349 = pneg %p150
        %p350 = pneg %p189
        %p351 = pneg %p186
        %s352 = sand.u32 %s176, 1
        %s353 = scalar_lea.sflag [#allocation5], %s352
        %s354 = sand.u32 %s176, 1
        %s355 = smul.addr %s354, 40
        %s356 = scalar_lea.vmem [#allocation8], %s355
        %s357 = smul.u32 %s29, 2
        %s358 = ssub.s32 0, %s357
        %s359 = smul.u32 %s28, %s358
        %s360 = sadd.s32 %s29, %s359
        %s361 = smul.u32 10, %s360
        %p362 = scmp.lt.s32.totalorder %s28, 1
        %s363 = scalar_select %p362, %s28, 1
        %p364 = scmp.lt.s32.totalorder %s361, 9
        %s365 = scalar_select %p364, %s361, 9
        %s366 = smul.addr %s363, 10
        %s367 = sadd.s32 %s365, %s366
        %s368 = smul.addr %s367, 4
        %s369 = scalar_lea.vmem %s0, %s368
        %s370 = smul.u32 %s29, 2
        %s371 = ssub.s32 0, %s370
        %s372 = smul.u32 %s28, %s371
        %s373 = sadd.s32 %s29, %s372
        %s374 = smul.u32 10, %s373
        %s375 = smul.u32 %s29, 2
        %s376 = ssub.s32 0, %s375
        %s377 = smul.u32 %s28, %s376
        %s378 = sadd.s32 %s29, %s377
        %s379 = smul.u32 10, %s378
        %p380 = scmp.lt.s32.totalorder %s379, 9
        %s381 = scalar_select %p380, %s379, 9
        %s382 = smul.addr %s381, 8
        %s383 = scalar_lea.vmem %s1, %s382
        %s384 = smul.u32 %s29, 2
        %s385 = ssub.s32 0, %s384
        %s386 = smul.u32 %s28, %s385
        %s387 = sadd.s32 %s29, %s386
        %s388 = smul.u32 10, %s387
        %s389 = smul.u32 %s29, 2
        %s390 = ssub.s32 0, %s389
        %s391 = smul.u32 %s28, %s390
        %s392 = sadd.s32 %s29, %s391
        %s393 = smul.u32 10, %s392
        %p395 = scmp.eq.s32.totalorder %s29, 0
        // Predicated region
        $region45: #{tpu_custom_call.1} parent=35 // pred_check
          %p396 = pneg %p395
        $region46: #{tpu_custom_call.1} parent=35 // pred_check_branch
          %398 = sbr.rel (%p396) target = $region48
        $region47: #{tpu_custom_call.1} parent=35 // pred_region
          %v399 = vld [vmem:[%s296] sm:$0xff]
          %400 = vst [vmem:[#allocation2] sm:$0xff] %v399
        $region48: #{tpu_custom_call.1} parent=35 // pred_fallthru
          _
        %v401 = vld [vmem:[%s305] sm:$0xf]
        %v402 = vld [vmem:[%s305 + $0x4] sm:$0xf]
        %v403 = vld [vmem:[%s305 + $0x8] sm:$0xf]
        %v404 = vld [vmem:[%s305 + $0xc] sm:$0xf]
        %v405 = vld [vmem:[%s305 + $0x10] sm:$0xf]
        %v406 = vld [vmem:[%s305 + $0x14] sm:$0xf]
        %v407 = vld [vmem:[%s305 + $0x18] sm:$0xf]
        %v408 = vld [vmem:[%s305 + $0x1c] sm:$0xf]
        %v409 = vld [vmem:[%s305 + $0x20] sm:$0xf]
        %v410 = vld [vmem:[%s305 + $0x24] sm:$0xf]
        %v411 = vld [vmem:[%s305 + $0x28] sm:$0xf]
        %v412 = vld [vmem:[%s305 + $0x2c] sm:$0xf]
        %v413 = vld [vmem:[%s305 + $0x30] sm:$0xf]
        %v414 = vld [vmem:[%s305 + $0x34] sm:$0xf]
        %v415 = vld [vmem:[%s305 + $0x38] sm:$0xf]
        %v416 = vld [vmem:[%s305 + $0x3c] sm:$0xf]
        %v417 = vld [vmem:[#allocation2] sm:$0xff]
        %s418 = smul.u32 %s28, 9
        %s419 = smul.addr %s418, 4
        %s420 = scalar_lea.vmem %s369, %s419
        %v421 = vld [vmem:[%s420] sm:$0xf]
        %v422 = vunpack.c.l.bf16 %v421
        %v423 = vpack.c.bf16 %v417, %v417
        %v440 = vunpack.c.l.b16 %v401
        %v441 = vunpack.c.l.b16 %v402
        %v442 = vunpack.c.l.b16 %v403
        %v443 = vunpack.c.l.b16 %v404
        %v444 = vunpack.c.l.b16 %v405
        %v445 = vunpack.c.l.b16 %v406
        %v446 = vunpack.c.l.b16 %v407
        %v447 = vunpack.c.l.b16 %v408
        %v448 = vunpack.c.l.b16 %v409
        %v449 = vunpack.c.l.b16 %v410
        %v450 = vunpack.c.l.b16 %v411
        %v451 = vunpack.c.l.b16 %v412
        %v452 = vunpack.c.l.b16 %v413
        %v453 = vunpack.c.l.b16 %v414
        %v454 = vunpack.c.l.b16 %v415
        %v455 = vunpack.c.l.b16 %v416
        %v456 = vpack.c.b16 %v441, %v440
        %v457 = vpack.c.b16 %v443, %v442
        %v458 = vpack.c.b16 %v445, %v444
        %v459 = vpack.c.b16 %v447, %v446
        %v460 = vpack.c.b16 %v449, %v448
        %v461 = vpack.c.b16 %v451, %v450
        %v462 = vpack.c.b16 %v453, %v452
        %v463 = vpack.c.b16 %v455, %v454
        %472 = vmatprep.subr.bf16.mxu0 0
        %473 = vmatpush1.bf16.msra.mxu0 %v456
        %474 = vmatprep.subr.bf16.mxu0 0
        %475 = vmatpush1.bf16.msra.mxu0 %v457
        %476 = vmatprep.subr.bf16.mxu0 0
        %477 = vmatpush1.bf16.msra.mxu0 %v458
        %478 = vmatprep.subr.bf16.mxu0 0
        %479 = vmatpush1.bf16.msra.mxu0 %v459
        %480 = vmatprep.subr.bf16.mxu0 0
        %481 = vmatpush1.bf16.msra.mxu0 %v460
        %482 = vmatprep.subr.bf16.mxu0 0
        %483 = vmatpush1.bf16.msra.mxu0 %v461
        %484 = vmatprep.subr.bf16.mxu0 0
        %485 = vmatpush1.bf16.msra.mxu0 %v462
        %486 = vmatprep.subr.bf16.mxu0 0
        %487 = vmatpush1.bf16.msra.mxu0 %v463
        %488 = vmatprep.subr.bf16.mxu0 0
        %489 = vmatpush1.bf16.msra.mxu0 0
        %490 = vmatprep.subr.bf16.mxu0 0
        %491 = vmatpush1.bf16.msra.mxu0 0
        %492 = vmatprep.subr.bf16.mxu0 0
        %493 = vmatpush1.bf16.msra.mxu0 0
        %494 = vmatprep.subr.bf16.mxu0 0
        %495 = vmatpush1.bf16.msra.mxu0 0
        %496 = vmatprep.subr.bf16.mxu0 0
        %497 = vmatpush1.bf16.msra.mxu0 0
        %498 = vmatprep.subr.bf16.mxu0 0
        %499 = vmatpush1.bf16.msra.mxu0 0
        %500 = vmatprep.subr.bf16.mxu0 0
        %501 = vmatpush1.bf16.msra.mxu0 0
        %502 = vmatprep.subr.bf16.mxu0 0
        %503 = vmatpush1.bf16.msra.mxu0 0
        %504 = vmatprep.mubr.bf16.mxu0 0
        %505 = vmatmul.mubr.bf16.gmra.mrb[0].mxu0 %v423
        %v506 = vpop.f32.mrb[0].mxu0
        %v507 = vadd.f32 0.0, %v506
        %v508 = vpop.f32.mrb[0].mxu0
        %v509 = vpop.f32.mrb[0].mxu0
        %v510 = vpop.f32.mrb[0].mxu0
        %511 = vdwg.mxu0
        %v512 = vadd.f32 %v422, %v507
        %v513 = vtanh.pop %v512
        %v514 = vsub.f32 %v513, %v417
        %s515 = smul.u32 %s418, 8
        %s516 = scalar_lea.vmem %s383, %s515
        %v517 = vld [vmem:[%s516] sm:$0xff]
        %519 = vset.pattern.permute.xlu0 0
        %520 = vperm.xlu0 %519, %v517
        %v521 = vpop.permute.xlu0 %520
        %v523 = vmul.f32 %v514, %v521
        %v524 = vadd.f32 %v417, %v523
        %v525 = vpack.c.bf16 %v524, %v524
        %s526 = smul.addr %s418, 4
        %s527 = scalar_lea.vmem %s356, %s526 [#allocation8]
        %528 = vst [vmem:[%s527] sm:$0xf] %v525
        %s529 = smul.u32 %s28, 7
        %s530 = sadd.s32 %s529, 1
        %s531 = smul.addr %s530, 4
        %s532 = scalar_lea.vmem %s369, %s531
        %v533 = vld [vmem:[%s532] sm:$0xf]
        %v534 = vunpack.c.l.bf16 %v533
        %535 = vmatprep.subr.bf16.mxu0 0
        %536 = vmatpush1.bf16.msra.mxu0 %v456
        %537 = vmatprep.subr.bf16.mxu0 0
        %538 = vmatpush1.bf16.msra.mxu0 %v457
        %539 = vmatprep.subr.bf16.mxu0 0
        %540 = vmatpush1.bf16.msra.mxu0 %v458
        %541 = vmatprep.subr.bf16.mxu0 0
        %542 = vmatpush1.bf16.msra.mxu0 %v459
        %543 = vmatprep.subr.bf16.mxu0 0
        %544 = vmatpush1.bf16.msra.mxu0 %v460
        %545 = vmatprep.subr.bf16.mxu0 0
        %546 = vmatpush1.bf16.msra.mxu0 %v461
        %547 = vmatprep.subr.bf16.mxu0 0
        %548 = vmatpush1.bf16.msra.mxu0 %v462
        %549 = vmatprep.subr.bf16.mxu0 0
        %550 = vmatpush1.bf16.msra.mxu0 %v463
        %551 = vmatprep.subr.bf16.mxu0 0
        %552 = vmatpush1.bf16.msra.mxu0 0
        %553 = vmatprep.subr.bf16.mxu0 0
        %554 = vmatpush1.bf16.msra.mxu0 0
        %555 = vmatprep.subr.bf16.mxu0 0
        %556 = vmatpush1.bf16.msra.mxu0 0
        %557 = vmatprep.subr.bf16.mxu0 0
        %558 = vmatpush1.bf16.msra.mxu0 0
        %559 = vmatprep.subr.bf16.mxu0 0
        %560 = vmatpush1.bf16.msra.mxu0 0
        %561 = vmatprep.subr.bf16.mxu0 0
        %562 = vmatpush1.bf16.msra.mxu0 0
        %563 = vmatprep.subr.bf16.mxu0 0
        %564 = vmatpush1.bf16.msra.mxu0 0
        %565 = vmatprep.subr.bf16.mxu0 0
        %566 = vmatpush1.bf16.msra.mxu0 0
        %567 = vmatprep.mubr.bf16.mxu0 0
        %568 = vmatmul.mubr.bf16.gmra.mrb[0].mxu0 %v525
        %v569 = vpop.f32.mrb[0].mxu0
        %v570 = vadd.f32 0.0, %v569
        %v571 = vpop.f32.mrb[0].mxu0
        %v572 = vpop.f32.mrb[0].mxu0
        %v573 = vpop.f32.mrb[0].mxu0
        %574 = vdwg.mxu0
        %v575 = vadd.f32 %v534, %v570
        %v576 = vtanh.pop %v575
        %v577 = vsub.f32 %v576, %v524
        %s578 = smul.u32 %s530, 8
        %s579 = scalar_lea.vmem %s383, %s578
        %v580 = vld [vmem:[%s579] sm:$0xff]
        %582 = vset.pattern.permute.xlu0 0
        %583 = vperm.xlu0 %582, %v580
        %v584 = vpop.permute.xlu0 %583
        %v586 = vmul.f32 %v577, %v584
        %v587 = vadd.f32 %v524, %v586
        %v588 = vpack.c.bf16 %v587, %v587
        %s589 = smul.addr %s530, 4
        %s590 = scalar_lea.vmem %s356, %s589 [#allocation8]
        %591 = vst [vmem:[%s590] sm:$0xf] %v588
        %s592 = smul.u32 %s28, 5
        %s593 = sadd.s32 %s592, 2
        %s594 = smul.addr %s593, 4
        %s595 = scalar_lea.vmem %s369, %s594
        %v596 = vld [vmem:[%s595] sm:$0xf]
        %v597 = vunpack.c.l.bf16 %v596
        %598 = vmatprep.subr.bf16.mxu0 0
        %599 = vmatpush1.bf16.msra.mxu0 %v456
        %600 = vmatprep.subr.bf16.mxu0 0
        %601 = vmatpush1.bf16.msra.mxu0 %v457
        %602 = vmatprep.subr.bf16.mxu0 0
        %603 = vmatpush1.bf16.msra.mxu0 %v458
        %604 = vmatprep.subr.bf16.mxu0 0
        %605 = vmatpush1.bf16.msra.mxu0 %v459
        %606 = vmatprep.subr.bf16.mxu0 0
        %607 = vmatpush1.bf16.msra.mxu0 %v460
        %608 = vmatprep.subr.bf16.mxu0 0
        %609 = vmatpush1.bf16.msra.mxu0 %v461
        %610 = vmatprep.subr.bf16.mxu0 0
        %611 = vmatpush1.bf16.msra.mxu0 %v462
        %612 = vmatprep.subr.bf16.mxu0 0
        %613 = vmatpush1.bf16.msra.mxu0 %v463
        %614 = vmatprep.subr.bf16.mxu0 0
        %615 = vmatpush1.bf16.msra.mxu0 0
        %616 = vmatprep.subr.bf16.mxu0 0
        %617 = vmatpush1.bf16.msra.mxu0 0
        %618 = vmatprep.subr.bf16.mxu0 0
        %619 = vmatpush1.bf16.msra.mxu0 0
        %620 = vmatprep.subr.bf16.mxu0 0
        %621 = vmatpush1.bf16.msra.mxu0 0
        %622 = vmatprep.subr.bf16.mxu0 0
        %623 = vmatpush1.bf16.msra.mxu0 0
        %624 = vmatprep.subr.bf16.mxu0 0
        %625 = vmatpush1.bf16.msra.mxu0 0
        %626 = vmatprep.subr.bf16.mxu0 0
        %627 = vmatpush1.bf16.msra.mxu0 0
        %628 = vmatprep.subr.bf16.mxu0 0
        %629 = vmatpush1.bf16.msra.mxu0 0
        %630 = vmatprep.mubr.bf16.mxu0 0
        %631 = vmatmul.mubr.bf16.gmra.mrb[0].mxu0 %v588
        %v632 = vpop.f32.mrb[0].mxu0
        %v633 = vadd.f32 0.0, %v632
        %v634 = vpop.f32.mrb[0].mxu0
        %v635 = vpop.f32.mrb[0].mxu0
        %v636 = vpop.f32.mrb[0].mxu0
        %637 = vdwg.mxu0
        %v638 = vadd.f32 %v597, %v633
        %v639 = vtanh.pop %v638
        %v640 = vsub.f32 %v639, %v587
        %s641 = smul.u32 %s593, 8
        %s642 = scalar_lea.vmem %s383, %s641
        %v643 = vld [vmem:[%s642] sm:$0xff]
        %645 = vset.pattern.permute.xlu0 0
        %646 = vperm.xlu0 %645, %v643
        %v647 = vpop.permute.xlu0 %646
        %v649 = vmul.f32 %v640, %v647
        %v650 = vadd.f32 %v587, %v649
        %v651 = vpack.c.bf16 %v650, %v650
        %s652 = smul.addr %s593, 4
        %s653 = scalar_lea.vmem %s356, %s652 [#allocation8]
        %654 = vst [vmem:[%s653] sm:$0xf] %v651
        %s655 = smul.u32 %s28, 3
        %s656 = sadd.s32 %s655, 3
        %s657 = smul.addr %s656, 4
        %s658 = scalar_lea.vmem %s369, %s657
        %v659 = vld [vmem:[%s658] sm:$0xf]
        %v660 = vunpack.c.l.bf16 %v659
        %661 = vmatprep.subr.bf16.mxu0 0
        %662 = vmatpush1.bf16.msra.mxu0 %v456
        %663 = vmatprep.subr.bf16.mxu0 0
        %664 = vmatpush1.bf16.msra.mxu0 %v457
        %665 = vmatprep.subr.bf16.mxu0 0
        %666 = vmatpush1.bf16.msra.mxu0 %v458
        %667 = vmatprep.subr.bf16.mxu0 0
        %668 = vmatpush1.bf16.msra.mxu0 %v459
        %669 = vmatprep.subr.bf16.mxu0 0
        %670 = vmatpush1.bf16.msra.mxu0 %v460
        %671 = vmatprep.subr.bf16.mxu0 0
        %672 = vmatpush1.bf16.msra.mxu0 %v461
        %673 = vmatprep.subr.bf16.mxu0 0
        %674 = vmatpush1.bf16.msra.mxu0 %v462
        %675 = vmatprep.subr.bf16.mxu0 0
        %676 = vmatpush1.bf16.msra.mxu0 %v463
        %677 = vmatprep.subr.bf16.mxu0 0
        %678 = vmatpush1.bf16.msra.mxu0 0
        %679 = vmatprep.subr.bf16.mxu0 0
        %680 = vmatpush1.bf16.msra.mxu0 0
        %681 = vmatprep.subr.bf16.mxu0 0
        %682 = vmatpush1.bf16.msra.mxu0 0
        %683 = vmatprep.subr.bf16.mxu0 0
        %684 = vmatpush1.bf16.msra.mxu0 0
        %685 = vmatprep.subr.bf16.mxu0 0
        %686 = vmatpush1.bf16.msra.mxu0 0
        %687 = vmatprep.subr.bf16.mxu0 0
        %688 = vmatpush1.bf16.msra.mxu0 0
        %689 = vmatprep.subr.bf16.mxu0 0
        %690 = vmatpush1.bf16.msra.mxu0 0
        %691 = vmatprep.subr.bf16.mxu0 0
        %692 = vmatpush1.bf16.msra.mxu0 0
        %693 = vmatprep.mubr.bf16.mxu0 0
        %694 = vmatmul.mubr.bf16.gmra.mrb[0].mxu0 %v651
        %v695 = vpop.f32.mrb[0].mxu0
        %v696 = vadd.f32 0.0, %v695
        %v697 = vpop.f32.mrb[0].mxu0
        %v698 = vpop.f32.mrb[0].mxu0
        %v699 = vpop.f32.mrb[0].mxu0
        %700 = vdwg.mxu0
        %v701 = vadd.f32 %v660, %v696
        %v702 = vtanh.pop %v701
        %v703 = vsub.f32 %v702, %v650
        %s704 = smul.u32 %s656, 8
        %s705 = scalar_lea.vmem %s383, %s704
        %v706 = vld [vmem:[%s705] sm:$0xff]
        %708 = vset.pattern.permute.xlu0 0
        %709 = vperm.xlu0 %708, %v706
        %v710 = vpop.permute.xlu0 %709
        %v712 = vmul.f32 %v703, %v710
        %v713 = vadd.f32 %v650, %v712
        %v714 = vpack.c.bf16 %v713, %v713
        %s715 = smul.addr %s656, 4
        %s716 = scalar_lea.vmem %s356, %s715 [#allocation8]
        %717 = vst [vmem:[%s716] sm:$0xf] %v714
        %s718 = sadd.s32 %s28, 4
        %s719 = smul.addr %s718, 4
        %s720 = scalar_lea.vmem %s369, %s719
        %v721 = vld [vmem:[%s720] sm:$0xf]
        %v722 = vunpack.c.l.bf16 %v721
        %723 = vmatprep.subr.bf16.mxu0 0
        %724 = vmatpush1.bf16.msra.mxu0 %v456
        %725 = vmatprep.subr.bf16.mxu0 0
        %726 = vmatpush1.bf16.msra.mxu0 %v457
        %727 = vmatprep.subr.bf16.mxu0 0
        %728 = vmatpush1.bf16.msra.mxu0 %v458
        %729 = vmatprep.subr.bf16.mxu0 0
        %730 = vmatpush1.bf16.msra.mxu0 %v459
        %731 = vmatprep.subr.bf16.mxu0 0
        %732 = vmatpush1.bf16.msra.mxu0 %v460
        %733 = vmatprep.subr.bf16.mxu0 0
        %734 = vmatpush1.bf16.msra.mxu0 %v461
        %735 = vmatprep.subr.bf16.mxu0 0
        %736 = vmatpush1.bf16.msra.mxu0 %v462
        %737 = vmatprep.subr.bf16.mxu0 0
        %738 = vmatpush1.bf16.msra.mxu0 %v463
        %739 = vmatprep.subr.bf16.mxu0 0
        %740 = vmatpush1.bf16.msra.mxu0 0
        %741 = vmatprep.subr.bf16.mxu0 0
        %742 = vmatpush1.bf16.msra.mxu0 0
        %743 = vmatprep.subr.bf16.mxu0 0
        %744 = vmatpush1.bf16.msra.mxu0 0
        %745 = vmatprep.subr.bf16.mxu0 0
        %746 = vmatpush1.bf16.msra.mxu0 0
        %747 = vmatprep.subr.bf16.mxu0 0
        %748 = vmatpush1.bf16.msra.mxu0 0
        %749 = vmatprep.subr.bf16.mxu0 0
        %750 = vmatpush1.bf16.msra.mxu0 0
        %751 = vmatprep.subr.bf16.mxu0 0
        %752 = vmatpush1.bf16.msra.mxu0 0
        %753 = vmatprep.subr.bf16.mxu0 0
        %754 = vmatpush1.bf16.msra.mxu0 0
        %755 = vmatprep.mubr.bf16.mxu0 0
        %756 = vmatmul.mubr.bf16.gmra.mrb[0].mxu0 %v714
        %v757 = vpop.f32.mrb[0].mxu0
        %v758 = vadd.f32 0.0, %v757
        %v759 = vpop.f32.mrb[0].mxu0
        %v760 = vpop.f32.mrb[0].mxu0
        %v761 = vpop.f32.mrb[0].mxu0
        %762 = vdwg.mxu0
        %v763 = vadd.f32 %v722, %v758
        %v764 = vtanh.pop %v763
        %v765 = vsub.f32 %v764, %v713
        %s766 = smul.u32 %s718, 8
        %s767 = scalar_lea.vmem %s383, %s766
        %v768 = vld [vmem:[%s767] sm:$0xff]
        %770 = vset.pattern.permute.xlu0 0
        %771 = vperm.xlu0 %770, %v768
        %v772 = vpop.permute.xlu0 %771
        %v774 = vmul.f32 %v765, %v772
        %v775 = vadd.f32 %v713, %v774
        %v776 = vpack.c.bf16 %v775, %v775
        %s777 = smul.addr %s718, 4
        %s778 = scalar_lea.vmem %s356, %s777 [#allocation8]
        %779 = vst [vmem:[%s778] sm:$0xf] %v776
        %s780 = ssub.s32 5, %s28
        %s781 = smul.addr %s780, 4
        %s782 = scalar_lea.vmem %s369, %s781
        %v783 = vld [vmem:[%s782] sm:$0xf]
        %v784 = vunpack.c.l.bf16 %v783
        %785 = vmatprep.subr.bf16.mxu0 0
        %786 = vmatpush1.bf16.msra.mxu0 %v456
        %787 = vmatprep.subr.bf16.mxu0 0
        %788 = vmatpush1.bf16.msra.mxu0 %v457
        %789 = vmatprep.subr.bf16.mxu0 0
        %790 = vmatpush1.bf16.msra.mxu0 %v458
        %791 = vmatprep.subr.bf16.mxu0 0
        %792 = vmatpush1.bf16.msra.mxu0 %v459
        %793 = vmatprep.subr.bf16.mxu0 0
        %794 = vmatpush1.bf16.msra.mxu0 %v460
        %795 = vmatprep.subr.bf16.mxu0 0
        %796 = vmatpush1.bf16.msra.mxu0 %v461
        %797 = vmatprep.subr.bf16.mxu0 0
        %798 = vmatpush1.bf16.msra.mxu0 %v462
        %799 = vmatprep.subr.bf16.mxu0 0
        %800 = vmatpush1.bf16.msra.mxu0 %v463
        %801 = vmatprep.subr.bf16.mxu0 0
        %802 = vmatpush1.bf16.msra.mxu0 0
        %803 = vmatprep.subr.bf16.mxu0 0
        %804 = vmatpush1.bf16.msra.mxu0 0
        %805 = vmatprep.subr.bf16.mxu0 0
        %806 = vmatpush1.bf16.msra.mxu0 0
        %807 = vmatprep.subr.bf16.mxu0 0
        %808 = vmatpush1.bf16.msra.mxu0 0
        %809 = vmatprep.subr.bf16.mxu0 0
        %810 = vmatpush1.bf16.msra.mxu0 0
        %811 = vmatprep.subr.bf16.mxu0 0
        %812 = vmatpush1.bf16.msra.mxu0 0
        %813 = vmatprep.subr.bf16.mxu0 0
        %814 = vmatpush1.bf16.msra.mxu0 0
        %815 = vmatprep.subr.bf16.mxu0 0
        %816 = vmatpush1.bf16.msra.mxu0 0
        %817 = vmatprep.mubr.bf16.mxu0 0
        %818 = vmatmul.mubr.bf16.gmra.mrb[0].mxu0 %v776
        %v819 = vpop.f32.mrb[0].mxu0
        %v820 = vadd.f32 0.0, %v819
        %v821 = vpop.f32.mrb[0].mxu0
        %v822 = vpop.f32.mrb[0].mxu0
        %v823 = vpop.f32.mrb[0].mxu0
        %824 = vdwg.mxu0
        %v825 = vadd.f32 %v784, %v820
        %v826 = vtanh.pop %v825
        %v827 = vsub.f32 %v826, %v775
        %s828 = smul.u32 %s780, 8
        %s829 = scalar_lea.vmem %s383, %s828
        %v830 = vld [vmem:[%s829] sm:$0xff]
        %832 = vset.pattern.permute.xlu0 0
        %833 = vperm.xlu0 %832, %v830
        %v834 = vpop.permute.xlu0 %833
        %v836 = vmul.f32 %v827, %v834
        %v837 = vadd.f32 %v775, %v836
        %v838 = vpack.c.bf16 %v837, %v837
        %s839 = smul.addr %s780, 4
        %s840 = scalar_lea.vmem %s356, %s839 [#allocation8]
        %841 = vst [vmem:[%s840] sm:$0xf] %v838
        %s842 = smul.u32 %s28, 4294967293
        %s843 = sadd.s32 %s842, 6
        %s844 = smul.addr %s843, 4
        %s845 = scalar_lea.vmem %s369, %s844
        %v846 = vld [vmem:[%s845] sm:$0xf]
        %v847 = vunpack.c.l.bf16 %v846
        %848 = vmatprep.subr.bf16.mxu0 0
        %849 = vmatpush1.bf16.msra.mxu0 %v456
        %850 = vmatprep.subr.bf16.mxu0 0
        %851 = vmatpush1.bf16.msra.mxu0 %v457
        %852 = vmatprep.subr.bf16.mxu0 0
        %853 = vmatpush1.bf16.msra.mxu0 %v458
        %854 = vmatprep.subr.bf16.mxu0 0
        %855 = vmatpush1.bf16.msra.mxu0 %v459
        %856 = vmatprep.subr.bf16.mxu0 0
        %857 = vmatpush1.bf16.msra.mxu0 %v460
        %858 = vmatprep.subr.bf16.mxu0 0
        %859 = vmatpush1.bf16.msra.mxu0 %v461
        %860 = vmatprep.subr.bf16.mxu0 0
        %861 = vmatpush1.bf16.msra.mxu0 %v462
        %862 = vmatprep.subr.bf16.mxu0 0
        %863 = vmatpush1.bf16.msra.mxu0 %v463
        %864 = vmatprep.subr.bf16.mxu0 0
        %865 = vmatpush1.bf16.msra.mxu0 0
        %866 = vmatprep.subr.bf16.mxu0 0
        %867 = vmatpush1.bf16.msra.mxu0 0
        %868 = vmatprep.subr.bf16.mxu0 0
        %869 = vmatpush1.bf16.msra.mxu0 0
        %870 = vmatprep.subr.bf16.mxu0 0
        %871 = vmatpush1.bf16.msra.mxu0 0
        %872 = vmatprep.subr.bf16.mxu0 0
        %873 = vmatpush1.bf16.msra.mxu0 0
        %874 = vmatprep.subr.bf16.mxu0 0
        %875 = vmatpush1.bf16.msra.mxu0 0
        %876 = vmatprep.subr.bf16.mxu0 0
        %877 = vmatpush1.bf16.msra.mxu0 0
        %878 = vmatprep.subr.bf16.mxu0 0
        %879 = vmatpush1.bf16.msra.mxu0 0
        %880 = vmatprep.mubr.bf16.mxu0 0
        %881 = vmatmul.mubr.bf16.gmra.mrb[0].mxu0 %v838
        %v882 = vpop.f32.mrb[0].mxu0
        %v883 = vadd.f32 0.0, %v882
        %v884 = vpop.f32.mrb[0].mxu0
        %v885 = vpop.f32.mrb[0].mxu0
        %v886 = vpop.f32.mrb[0].mxu0
        %887 = vdwg.mxu0
        %v888 = vadd.f32 %v847, %v883
        %v889 = vtanh.pop %v888
        %v890 = vsub.f32 %v889, %v837
        %s891 = smul.u32 %s843, 8
        %s892 = scalar_lea.vmem %s383, %s891
        %v893 = vld [vmem:[%s892] sm:$0xff]
        %895 = vset.pattern.permute.xlu0 0
        %896 = vperm.xlu0 %895, %v893
        %v897 = vpop.permute.xlu0 %896
        %v899 = vmul.f32 %v890, %v897
        %v900 = vadd.f32 %v837, %v899
        %v901 = vpack.c.bf16 %v900, %v900
        %s902 = smul.addr %s843, 4
        %s903 = scalar_lea.vmem %s356, %s902 [#allocation8]
        %904 = vst [vmem:[%s903] sm:$0xf] %v901
        %s905 = smul.u32 %s28, 4294967291
        %s906 = sadd.s32 %s905, 7
        %s907 = smul.addr %s906, 4
        %s908 = scalar_lea.vmem %s369, %s907
        %v909 = vld [vmem:[%s908] sm:$0xf]
        %v910 = vunpack.c.l.bf16 %v909
        %911 = vmatprep.subr.bf16.mxu0 0
        %912 = vmatpush1.bf16.msra.mxu0 %v456
        %913 = vmatprep.subr.bf16.mxu0 0
        %914 = vmatpush1.bf16.msra.mxu0 %v457
        %915 = vmatprep.subr.bf16.mxu0 0
        %916 = vmatpush1.bf16.msra.mxu0 %v458
        %917 = vmatprep.subr.bf16.mxu0 0
        %918 = vmatpush1.bf16.msra.mxu0 %v459
        %919 = vmatprep.subr.bf16.mxu0 0
        %920 = vmatpush1.bf16.msra.mxu0 %v460
        %921 = vmatprep.subr.bf16.mxu0 0
        %922 = vmatpush1.bf16.msra.mxu0 %v461
        %923 = vmatprep.subr.bf16.mxu0 0
        %924 = vmatpush1.bf16.msra.mxu0 %v462
        %925 = vmatprep.subr.bf16.mxu0 0
        %926 = vmatpush1.bf16.msra.mxu0 %v463
        %927 = vmatprep.subr.bf16.mxu0 0
        %928 = vmatpush1.bf16.msra.mxu0 0
        %929 = vmatprep.subr.bf16.mxu0 0
        %930 = vmatpush1.bf16.msra.mxu0 0
        %931 = vmatprep.subr.bf16.mxu0 0
        %932 = vmatpush1.bf16.msra.mxu0 0
        %933 = vmatprep.subr.bf16.mxu0 0
        %934 = vmatpush1.bf16.msra.mxu0 0
        %935 = vmatprep.subr.bf16.mxu0 0
        %936 = vmatpush1.bf16.msra.mxu0 0
        %937 = vmatprep.subr.bf16.mxu0 0
        %938 = vmatpush1.bf16.msra.mxu0 0
        %939 = vmatprep.subr.bf16.mxu0 0
        %940 = vmatpush1.bf16.msra.mxu0 0
        %941 = vmatprep.subr.bf16.mxu0 0
        %942 = vmatpush1.bf16.msra.mxu0 0
        %943 = vmatprep.mubr.bf16.mxu0 0
        %944 = vmatmul.mubr.bf16.gmra.mrb[0].mxu0 %v901
        %v945 = vpop.f32.mrb[0].mxu0
        %v946 = vadd.f32 0.0, %v945
        %v947 = vpop.f32.mrb[0].mxu0
        %v948 = vpop.f32.mrb[0].mxu0
        %v949 = vpop.f32.mrb[0].mxu0
        %950 = vdwg.mxu0
        %v951 = vadd.f32 %v910, %v946
        %v952 = vtanh.pop %v951
        %v953 = vsub.f32 %v952, %v900
        %s954 = smul.u32 %s906, 8
        %s955 = scalar_lea.vmem %s383, %s954
        %v956 = vld [vmem:[%s955] sm:$0xff]
        %958 = vset.pattern.permute.xlu0 0
        %959 = vperm.xlu0 %958, %v956
        %v960 = vpop.permute.xlu0 %959
        %v962 = vmul.f32 %v953, %v960
        %v963 = vadd.f32 %v900, %v962
        %v964 = vpack.c.bf16 %v963, %v963
        %s965 = smul.addr %s906, 4
        %s966 = scalar_lea.vmem %s356, %s965 [#allocation8]
        %967 = vst [vmem:[%s966] sm:$0xf] %v964
        %s968 = smul.u32 %s28, 4294967289
        %s969 = sadd.s32 %s968, 8
        %s970 = smul.addr %s969, 4
        %s971 = scalar_lea.vmem %s369, %s970
        %v972 = vld [vmem:[%s971] sm:$0xf]
        %v973 = vunpack.c.l.bf16 %v972
        %974 = vmatprep.subr.bf16.mxu0 0
        %975 = vmatpush1.bf16.msra.mxu0 %v456
        %976 = vmatprep.subr.bf16.mxu0 0
        %977 = vmatpush1.bf16.msra.mxu0 %v457
        %978 = vmatprep.subr.bf16.mxu0 0
        %979 = vmatpush1.bf16.msra.mxu0 %v458
        %980 = vmatprep.subr.bf16.mxu0 0
        %981 = vmatpush1.bf16.msra.mxu0 %v459
        %982 = vmatprep.subr.bf16.mxu0 0
        %983 = vmatpush1.bf16.msra.mxu0 %v460
        %984 = vmatprep.subr.bf16.mxu0 0
        %985 = vmatpush1.bf16.msra.mxu0 %v461
        %986 = vmatprep.subr.bf16.mxu0 0
        %987 = vmatpush1.bf16.msra.mxu0 %v462
        %988 = vmatprep.subr.bf16.mxu0 0
        %989 = vmatpush1.bf16.msra.mxu0 %v463
        %990 = vmatprep.subr.bf16.mxu0 0
        %991 = vmatpush1.bf16.msra.mxu0 0
        %992 = vmatprep.subr.bf16.mxu0 0
        %993 = vmatpush1.bf16.msra.mxu0 0
        %994 = vmatprep.subr.bf16.mxu0 0
        %995 = vmatpush1.bf16.msra.mxu0 0
        %996 = vmatprep.subr.bf16.mxu0 0
        %997 = vmatpush1.bf16.msra.mxu0 0
        %998 = vmatprep.subr.bf16.mxu0 0
        %999 = vmatpush1.bf16.msra.mxu0 0
        %1000 = vmatprep.subr.bf16.mxu0 0
        %1001 = vmatpush1.bf16.msra.mxu0 0
        %1002 = vmatprep.subr.bf16.mxu0 0
        %1003 = vmatpush1.bf16.msra.mxu0 0
        %1004 = vmatprep.subr.bf16.mxu0 0
        %1005 = vmatpush1.bf16.msra.mxu0 0
        %1006 = vmatprep.mubr.bf16.mxu0 0
        %1007 = vmatmul.mubr.bf16.gmra.mrb[0].mxu0 %v964
        %v1008 = vpop.f32.mrb[0].mxu0
        %v1009 = vadd.f32 0.0, %v1008
        %v1010 = vpop.f32.mrb[0].mxu0
        %v1011 = vpop.f32.mrb[0].mxu0
        %v1012 = vpop.f32.mrb[0].mxu0
        %1013 = vdwg.mxu0
        %v1014 = vadd.f32 %v973, %v1009
        %v1015 = vtanh.pop %v1014
        %v1016 = vsub.f32 %v1015, %v963
        %s1017 = smul.u32 %s969, 8
        %s1018 = scalar_lea.vmem %s383, %s1017
        %v1019 = vld [vmem:[%s1018] sm:$0xff]
        %1021 = vset.pattern.permute.xlu0 0
        %1022 = vperm.xlu0 %1021, %v1019
        %v1023 = vpop.permute.xlu0 %1022
        %v1025 = vmul.f32 %v1016, %v1023
        %v1026 = vadd.f32 %v963, %v1025
        %v1027 = vpack.c.bf16 %v1026, %v1026
        %s1028 = smul.addr %s969, 4
        %s1029 = scalar_lea.vmem %s356, %s1028 [#allocation8]
        %1030 = vst [vmem:[%s1029] sm:$0xf] %v1027
        %s1031 = smul.u32 %s28, 4294967287
        %s1032 = sadd.s32 %s1031, 9
        %s1033 = smul.addr %s1032, 4
        %s1034 = scalar_lea.vmem %s369, %s1033
        %v1035 = vld [vmem:[%s1034] sm:$0xf]
        %v1036 = vunpack.c.l.bf16 %v1035
        %1037 = vmatprep.subr.bf16.mxu0 0
        %1038 = vmatpush1.bf16.msra.mxu0 %v456
        %1039 = vmatprep.subr.bf16.mxu0 0
        %1040 = vmatpush1.bf16.msra.mxu0 %v457
        %1041 = vmatprep.subr.bf16.mxu0 0
        %1042 = vmatpush1.bf16.msra.mxu0 %v458
        %1043 = vmatprep.subr.bf16.mxu0 0
        %1044 = vmatpush1.bf16.msra.mxu0 %v459
        %1045 = vmatprep.subr.bf16.mxu0 0
        %1046 = vmatpush1.bf16.msra.mxu0 %v460
        %1047 = vmatprep.subr.bf16.mxu0 0
        %1048 = vmatpush1.bf16.msra.mxu0 %v461
        %1049 = vmatprep.subr.bf16.mxu0 0
        %1050 = vmatpush1.bf16.msra.mxu0 %v462
        %1051 = vmatprep.subr.bf16.mxu0 0
        %1052 = vmatpush1.bf16.msra.mxu0 %v463
        %1053 = vmatprep.subr.bf16.mxu0 0
        %1054 = vmatpush1.bf16.msra.mxu0 0
        %1055 = vmatprep.subr.bf16.mxu0 0
        %1056 = vmatpush1.bf16.msra.mxu0 0
        %1057 = vmatprep.subr.bf16.mxu0 0
        %1058 = vmatpush1.bf16.msra.mxu0 0
        %1059 = vmatprep.subr.bf16.mxu0 0
        %1060 = vmatpush1.bf16.msra.mxu0 0
        %1061 = vmatprep.subr.bf16.mxu0 0
        %1062 = vmatpush1.bf16.msra.mxu0 0
        %1063 = vmatprep.subr.bf16.mxu0 0
        %1064 = vmatpush1.bf16.msra.mxu0 0
        %1065 = vmatprep.subr.bf16.mxu0 0
        %1066 = vmatpush1.bf16.msra.mxu0 0
        %1067 = vmatprep.subr.bf16.mxu0 0
        %1068 = vmatpush1.bf16.msra.mxu0 0
        %1069 = vmatprep.mubr.bf16.mxu0 0
        %1070 = vmatmul.mubr.bf16.gmra.mrb[0].mxu0 %v1027
        %v1071 = vpop.f32.mrb[0].mxu0
        %v1072 = vadd.f32 0.0, %v1071
        %v1073 = vpop.f32.mrb[0].mxu0
        %v1074 = vpop.f32.mrb[0].mxu0
        %v1075 = vpop.f32.mrb[0].mxu0
        %1076 = vdwg.mxu0
        %v1077 = vadd.f32 %v1036, %v1072
        %v1078 = vtanh.pop %v1077
        %v1079 = vsub.f32 %v1078, %v1026
        %s1080 = smul.u32 %s1032, 8
        %s1081 = scalar_lea.vmem %s383, %s1080
        %v1082 = vld [vmem:[%s1081] sm:$0xff]
        %1084 = vset.pattern.permute.xlu0 0
        %1085 = vperm.xlu0 %1084, %v1082
        %v1086 = vpop.permute.xlu0 %1085
        %v1088 = vmul.f32 %v1079, %v1086
        %v1089 = vadd.f32 %v1026, %v1088
        %v1090 = vpack.c.bf16 %v1089, %v1089
        %s1091 = smul.addr %s1032, 4
        %s1092 = scalar_lea.vmem %s356, %s1091 [#allocation8]
        %1093 = vst [vmem:[%s1092] sm:$0xf] %v1090
        %1094 = vst [vmem:[#allocation2] sm:$0xff] %v1089
        %s1095 = sand.u32 %s176, 1
        %s1096 = scalar_lea.sflag [#allocation5], %s1095
        %s1097 = sand.u32 %s176, 1
        %s1098 = smul.addr %s1097, 40
        %s1099 = scalar_lea.vmem [#allocation8], %s1098
        // Predicated region
        $region49: #{tpu_custom_call.1} parent=35 // pred_check
          %p1100 = pneg %p186
        $region50: #{tpu_custom_call.1} parent=35 // pred_check_branch
          %1102 = sbr.rel (%p1100) target = $region52
        $region51: #{tpu_custom_call.1} parent=35 // pred_region
          %s1103 = smul.u32 %s29, 2
          %s1104 = ssub.s32 0, %s1103
          %s1105 = smul.u32 %s28, %s1104
          %s1106 = sadd.s32 %s29, %s1105
          %s1107 = smul.u32 10, %s1106
          %s1109 = ssub.s32 640, 640
          %1110 = vsyncadd %s1096, %s1109
          %s1111 = smul.addr %s28, 10
          %s1112 = sadd.s32 %s1107, %s1111
          %s1113 = smul.addr %s1112, 64
          %s1114 = scalar_lea.hbm %s4, %s1113
          %s1115 = sshll.u32 %s1099, 4
          %s1116 = int_to_ptr.vmem [resolvable:$true] %s1115
          %1121 = dma.vmem_to_hbm [thread:$0]  %s1116, 640, %s1114, %s1096, 64, 64, 4
        $region52: #{tpu_custom_call.1} parent=35 // pred_fallthru
          _
      $region36: #{tpu_custom_call.1} parent=5 // pred_fallthru
        _
      %p1122 = scmp.le.s32.totalorder 2, %s19
      // Predicated region
      $region53: #{tpu_custom_call.1} parent=5 // pred_check
        %p1123 = pneg %p1122
      $region54: #{tpu_custom_call.1} parent=5 // pred_check_branch
        %1125 = sbr.rel (%p1123) target = $region56
      $region55: #{tpu_custom_call.1} parent=5 // pred_region
        %s1126 = ssub.s32 %s19, 2
        // Predicated region
        $region57: #{tpu_custom_call.1} parent=55 // pred_check
          %p1127 = pneg %p192
        $region58: #{tpu_custom_call.1} parent=55 // pred_check_branch
          %1129 = sbr.rel (%p1127) target = $region60
        $region59: #{tpu_custom_call.1} parent=55 // pred_region
          %s1130 = sand.u32 %s177, 1
          %s1131 = scalar_lea.sflag [#allocation5], %s1130
          %s1132 = sand.u32 %s177, 1
          %s1133 = smul.addr %s1132, 40
          %s1134 = scalar_lea.vmem [#allocation8], %s1133
          %1135 = dma.done %s1131, 640
        $region60: #{tpu_custom_call.1} parent=55 // pred_fallthru
          _
      $region56: #{tpu_custom_call.1} parent=5 // pred_fallthru
        _
    $region6: #{tpu_custom_call.1} parent=1 // loop_footer
      %s23 = sadd.s32 1, %s19
    $region7: #{tpu_custom_call.1} parent=1 // loop_footer_branch
      %18 = sbr.rel target = $region3
    $region8: #{tpu_custom_call.1} parent=1 // loop_exit
      _
    %1136 = vsyncpa [#allocation4], 1
    %s1137 = scalar_lea.sflag [#allocation4], 1
    %1138 = vsyncpa %s1137, 1
    %1139 = vsyncpa [#allocation7], 1
    %s1140 = scalar_lea.sflag [#allocation7], 1
    %1141 = vsyncpa %s1140, 1
    %1142 = vsyncpa [#allocation5], 1
    %s1143 = scalar_lea.sflag [#allocation5], 1
    %1144 = vsyncpa %s1143, 1

</llo_original>
